<compile_context>
chip_gen: v7x
topology: tpu7x:2x2x1
jax: 0.10.0
libtpu: 0.0.40
codegen_flags: <defaults>
</compile_context>

<pallas_src>
import functools
import math

import jax
import jax.numpy as jnp
from jax.experimental import pallas as pl
from jax.experimental.pallas import tpu as pltpu


base = {'300': [64, 64, 'M', 128, 128, 'M', 256, 256, 256, 'C',
                512, 512, 512, 'M', 512, 512, 512],
        '640': [64, 64, 'M', 128, 128, 'M', 256, 256, 256, 'C',
                512, 512, 512, 'M', 512, 512, 512]}

_VMEM_LIMIT = 48 * 1024 * 1024   # > 32 MiB default scoped, < 64 MiB v7x physical


def _round_up(x, m):
    return ((x + m - 1) // m) * m


def _ceil_div(a, b):
    return -(-a // b)


# ----------------------------------------------------------------------------
# Pallas kernels
# ----------------------------------------------------------------------------
def _matmul_bias_kernel(x_ref, w_ref, b_ref, o_ref, acc_ref, *, relu):
    """Tiled GEMM: grid=(M,N,K) with K last ('arbitrary'); bias(+ReLU) on last K."""
    k = pl.program_id(2)

    @pl.when(k == 0)
    def _():
        acc_ref[...] = jnp.zeros_like(acc_ref)

    acc_ref[...] += jnp.dot(x_ref[...], w_ref[...],
                            preferred_element_type=jnp.float32)

    @pl.when(k == pl.num_programs(2) - 1)
    def _():
        r = acc_ref[...] + b_ref[...]
        if relu:
            r = jnp.maximum(r, 0.0)
        o_ref[...] = r.astype(o_ref.dtype)


def _maxpool_kernel(x_ref, o_ref, *, kt):
    """Single-pass pooling: load every tap slab, reduce with a maximum tree."""
    v = x_ref[0]
    for t in range(1, kt):
        v = jnp.maximum(v, x_ref[t])
    o_ref[...] = v


def _l2norm_kernel(x_ref, w_ref, o_ref):
    """F.normalize(x, dim=channel) * weight[channel]  (eps = 1e-12 on the norm)."""
    x = x_ref[...].astype(jnp.float32)
    ss = jnp.sum(x * x, axis=-1, keepdims=True)
    inv = jax.lax.rsqrt(jnp.maximum(ss, 1e-24))     # == 1 / max(||x||, 1e-12)
    o_ref[...] = (x * inv * w_ref[...]).astype(o_ref.dtype)


# ----------------------------------------------------------------------------
# Wrappers
# ----------------------------------------------------------------------------
def _im2col(x_pad, ksize, oh, ow, stride, dilation):
    """(N,Hp,Wp,C) -> (N*OH*OW, ksize*ksize*C) with taps folded into K (bf16)."""
    n, _, _, c = x_pad.shape
    cols = []
    for i in range(ksize):
        for j in range(ksize):
            sl = x_pad[:,
                       i * dilation: i * dilation + (oh - 1) * stride + 1: stride,
                       j * dilation: j * dilation + (ow - 1) * stride + 1: stride,
                       :]
            cols.append(sl.reshape(n * oh * ow, c))
    return jnp.concatenate(cols, axis=-1)


def _pick_k_tile(kdim):
    """Smallest padded K among 128-aligned tile candidates (largest tile on ties)."""
    best_kp, best_t = None, None
    for t in (512, 384, 256, 128):
        kp = _round_up(kdim, t)
        if best_kp is None or kp < best_kp:
            best_kp, best_t = kp, t
    return best_kp, best_t


def conv2d_pallas(x_nhwc, w_taps, bias, *, stride=1, pad=0, dilation=1, relu=False):
    n, h, w, cin = x_nhwc.shape
    kt, _, cout = w_taps.shape
    ksz = int(round(math.sqrt(kt)))
    oh = (h + 2 * pad - dilation * (ksz - 1) - 1) // stride + 1
    ow = (w + 2 * pad - dilation * (ksz - 1) - 1) // stride + 1

    xp = x_nhwc.astype(jnp.bfloat16)
    if pad:
        xp = jnp.pad(xp, ((0, 0), (pad, pad), (pad, pad), (0, 0)))
    patches = _im2col(xp, ksz, oh, ow, stride, dilation)        # (M, K) bf16

    m = n * oh * ow
    kdim = kt * cin
    kpad, tk = _pick_k_tile(kdim)
    npad = _round_up(cout, 128)
    tn = 256 if npad % 256 == 0 else 128
    tm = min(512, _round_up(m, 8))
    mpad = _round_up(m, tm)

    patches = jnp.pad(patches, ((0, mpad - m), (0, kpad - kdim)))
    wmat = jnp.pad(w_taps.astype(jnp.bfloat16).reshape(kdim, cout),
                   ((0, kpad - kdim), (0, npad - cout)))
    bvec = jnp.pad(bias.astype(jnp.float32), (0, npad - cout)).reshape(1, npad)

    grid = (mpad // tm, npad // tn, kpad // tk)
    out = pl.pallas_call(
        functools.partial(_matmul_bias_kernel, relu=relu),
        out_shape=jax.ShapeDtypeStruct((mpad, npad), jnp.bfloat16),
        grid_spec=pltpu.PrefetchScalarGridSpec(
            num_scalar_prefetch=0,
            grid=grid,
            in_specs=[pl.BlockSpec((tm, tk), lambda i, j, k: (i, k)),
                      pl.BlockSpec((tk, tn), lambda i, j, k: (k, j)),
                      pl.BlockSpec((1, tn), lambda i, j, k: (0, j))],
            out_specs=pl.BlockSpec((tm, tn), lambda i, j, k: (i, j)),
            scratch_shapes=[pltpu.VMEM((tm, tn), jnp.float32)]),
        compiler_params=pltpu.CompilerParams(
            dimension_semantics=("parallel", "parallel", "arbitrary"),
            vmem_limit_bytes=_VMEM_LIMIT),
    )(patches, wmat, bvec)
    return out[:m, :cout].reshape(n, oh, ow, cout)


def maxpool2d_pallas(x_nhwc, *, ksize, stride, pad=0, ceil_mode=False):
    n, h, w, c = x_nhwc.shape
    if ceil_mode:
        oh = _ceil_div(h + 2 * pad - ksize, stride) + 1
        ow = _ceil_div(w + 2 * pad - ksize, stride) + 1
        if (oh - 1) * stride >= h + pad:
            oh -= 1
        if (ow - 1) * stride >= w + pad:
            ow -= 1
    else:
        oh = (h + 2 * pad - ksize) // stride + 1
        ow = (w + 2 * pad - ksize) // stride + 1

    need_h = (oh - 1) * stride + ksize
    need_w = (ow - 1) * stride + ksize
    extra_h = max(0, need_h - (h + 2 * pad))
    extra_w = max(0, need_w - (w + 2 * pad))
    xp = x_nhwc
    if pad or extra_h or extra_w:
        xp = jnp.pad(x_nhwc, ((0, 0), (pad, pad + extra_h),
                              (pad, pad + extra_w), (0, 0)),
                     constant_values=-jnp.inf)

    kt = ksize * ksize
    taps = []
    for i in range(ksize):
        for j in range(ksize):
            sl = xp[:,
                    i: i + (oh - 1) * stride + 1: stride,
                    j: j + (ow - 1) * stride + 1: stride,
                    :]
            taps.append(sl.reshape(n * oh * ow, c))
    stacked = jnp.stack(taps)                                    # (KT, M, C)

    m = n * oh * ow
    tm = min(512, _round_up(m, 8))
    mpad = _round_up(m, tm)
    stacked = jnp.pad(stacked, ((0, 0), (0, mpad - m), (0, 0)))

    out = pl.pallas_call(
        functools.partial(_maxpool_kernel, kt=kt),
        out_shape=jax.ShapeDtypeStruct((mpad, c), x_nhwc.dtype),
        grid_spec=pltpu.PrefetchScalarGridSpec(
            num_scalar_prefetch=0,
            grid=(mpad // tm,),
            in_specs=[pl.BlockSpec((kt, tm, c), lambda i: (0, i, 0))],
            out_specs=pl.BlockSpec((tm, c), lambda i: (i, 0))),
        compiler_params=pltpu.CompilerParams(
            dimension_semantics=("parallel",),
            vmem_limit_bytes=_VMEM_LIMIT),
    )(stacked)
    return out[:m].reshape(n, oh, ow, c)


def l2norm_pallas(x_nhwc, weight):
    n, h, w, c = x_nhwc.shape
    m = n * h * w
    tm = min(512, _round_up(m, 8))
    mpad = _round_up(m, tm)
    xf = jnp.pad(x_nhwc.reshape(m, c), ((0, mpad - m), (0, 0)))

    out = pl.pallas_call(
        _l2norm_kernel,
        out_shape=jax.ShapeDtypeStruct((mpad, c), x_nhwc.dtype),
        grid_spec=pltpu.PrefetchScalarGridSpec(
            num_scalar_prefetch=0,
            grid=(mpad // tm,),
            in_specs=[pl.BlockSpec((tm, c), lambda i: (i, 0)),
                      pl.BlockSpec((1, c), lambda i: (0, 0))],
            out_specs=pl.BlockSpec((tm, c), lambda i: (i, 0))),
        compiler_params=pltpu.CompilerParams(
            dimension_semantics=("parallel",),
            vmem_limit_bytes=_VMEM_LIMIT),
    )(xf, weight.astype(jnp.float32).reshape(1, c))
    return out[:m].reshape(n, h, w, c)


# ----------------------------------------------------------------------------
# Module-style layers (deterministic synthetic parameters)
# ----------------------------------------------------------------------------
def key_stream(seed=0):
    k = jax.random.PRNGKey(seed)
    i = 0
    while True:
        yield jax.random.fold_in(k, i)
        i += 1


class Conv:
    def __init__(self, key, cin, cout, k, *, stride=1, pad=0, dil=1, relu=False):
        kw, kb = jax.random.split(key)
        self.w = (jax.random.normal(kw, (k * k, cin, cout), jnp.float32)
                  * (1.0 / math.sqrt(k * k * cin))).astype(jnp.bfloat16)
        self.b = jax.random.normal(kb, (cout,), jnp.float32) * 0.01
        self.stride, self.pad, self.dil, self.relu = stride, pad, dil, relu

    def __call__(self, x):
        return conv2d_pallas(x, self.w, self.b, stride=self.stride, pad=self.pad,
                             dilation=self.dil, relu=self.relu)


class MaxPool:
    def __init__(self, ksize, stride, pad=0, ceil_mode=False):
        self.ksize, self.stride, self.pad, self.ceil = ksize, stride, pad, ceil_mode

    def __call__(self, x):
        return maxpool2d_pallas(x, ksize=self.ksize, stride=self.stride,
                                pad=self.pad, ceil_mode=self.ceil)


class Identity:
    # Stands in for nn.ReLU in the layer list (ReLU fused into preceding Conv);
    # keeps layer indices identical to the PyTorch vgg() layer list.
    def __call__(self, x):
        return x


class L2Norm:
    def __init__(self, in_features, scale):
        self.weight = jnp.full((in_features,), float(scale), jnp.float32)

    def __call__(self, x):
        return l2norm_pallas(x, self.weight)


class FusedHead:
    """loc (Cout=4) + conf (Cout=2) 3x3 convs fused into one lane-padded conv."""
    def __init__(self, key, cin):
        kl, kbl, kc, kbc = jax.random.split(key, 4)
        scale = 1.0 / math.sqrt(9 * cin)
        w_loc = jax.random.normal(kl, (9, cin, 4), jnp.float32) * scale
        b_loc = jax.random.normal(kbl, (4,), jnp.float32) * 0.01
        w_conf = jax.random.normal(kc, (9, cin, 2), jnp.float32) * scale
        b_conf = jax.random.normal(kbc, (2,), jnp.float32) * 0.01
        self.w = jnp.concatenate([w_loc, w_conf], axis=-1).astype(jnp.bfloat16)
        self.b = jnp.concatenate([b_loc, b_conf])

    def __call__(self, x):
        y = conv2d_pallas(x, self.w, self.b, pad=1, relu=False)   # (N,H,W,6)
        return y[..., :4], y[..., 4:6]


def build_vgg(kg, cfg, in_ch=3):
    layers = []
    for v in cfg:
        if v == 'M':
            layers.append(MaxPool(2, 2))
        elif v == 'C':
            layers.append(MaxPool(2, 2, ceil_mode=True))
        else:
            layers.append(Conv(next(kg), in_ch, v, 3, pad=1, relu=True))
            layers.append(Identity())
            in_ch = v
    layers.append(MaxPool(3, 1, pad=1))                                   # pool5
    layers.append(Conv(next(kg), 512, 1024, 3, pad=6, dil=6, relu=True))  # conv6
    layers.append(Identity())
    layers.append(Conv(next(kg), 1024, 1024, 1, relu=True))               # conv7
    layers.append(Identity())
    return layers


def build_extras(kg):
    return [
        Conv(next(kg), 1024, 256, 1, relu=True), Identity(),                  # conv6_1
        Conv(next(kg), 256, 512, 3, stride=2, pad=1, relu=True), Identity(),  # conv6_2
        Conv(next(kg), 512, 128, 1, relu=True), Identity(),                   # conv7_1
        Conv(next(kg), 128, 256, 3, stride=2, pad=1, relu=True), Identity(),  # conv7_2
    ]


class SFDNet:
    def __init__(self, phase, base_layers, extras, heads):
        self.phase = phase
        self.base = base_layers
        self.conv3_Norm = L2Norm(256, 10)
        self.conv4_Norm = L2Norm(512, 8)
        self.conv5_Norm = L2Norm(512, 5)
        self.extras = extras
        self.heads = heads     # fused loc+conf convs (same math as separate ones)

    def forward(self, x_nchw):
        x = jnp.transpose(x_nchw, (0, 2, 3, 1)).astype(jnp.bfloat16)   # NCHW->NHWC
        nbat = x.shape[0]
        sources, loc, conf = [], [], []
        for k in range(16):
            x = self.base[k](x)
        sources.append(self.conv3_Norm(x))        # conv3_3 / 256 ch
        for k in range(16, 23):
            x = self.base[k](x)
        sources.append(self.conv4_Norm(x))        # conv4_3 / 512 ch
        for k in range(23, 30):
            x = self.base[k](x)
        sources.append(self.conv5_Norm(x))        # conv5_3 / 512 ch
        for k in range(30, len(self.base)):
            x = self.base[k](x)
        sources.append(x)                         # fc7 / 1024 ch
        x = self.extras[0](x); x = self.extras[1](x)
        x = self.extras[2](x); x = self.extras[3](x)
        sources.append(x)                         # conv6_2 / 512 ch
        x = self.extras[4](x); x = self.extras[5](x)
        x = self.extras[6](x); x = self.extras[7](x)
        sources.append(x)                         # conv7_2 / 256 ch

        for s, hd in zip(sources, self.heads):
            # head outputs are already NHWC, so permute(0,2,3,1).contiguous() is identity
            l_out, c_out = hd(s)
            loc.append(l_out.astype(jnp.float32).reshape(nbat, -1))
            conf.append(c_out.astype(jnp.float32).reshape(nbat, -1))
        loc = jnp.concatenate(loc, axis=1)
        conf = jnp.concatenate(conf, axis=1)
        if self.phase == 'test':
            return (loc.reshape(nbat, -1, 4),
                    jax.nn.softmax(conf.reshape(-1, 2), axis=-1))
        return (loc.reshape(nbat, -1, 4), conf.reshape(nbat, -1, 2))


# ----------------------------------------------------------------------------
if __name__ == "__main__":
    kg = key_stream(0)
    base_layers = build_vgg(kg, base['300'])
    extras = build_extras(kg)
    src_channels = [256, 512, 512, 1024, 512, 256]
    heads = [FusedHead(next(kg), c) for c in src_channels]
    net = SFDNet('train', base_layers, extras, heads)

    # Small deterministic input (NCHW, 3 image channels, 32x32 spatial).
    x = jax.random.normal(jax.random.PRNGKey(0), (2, 3, 32, 32), jnp.float32)

    loc_out, conf_out = net.forward(x)
    jax.block_until_ready((loc_out, conf_out))

    # 32x32 input -> priors per source = 64+16+4+4+1+1 = 90
    assert loc_out.shape == (2, 90, 4), loc_out.shape
    assert conf_out.shape == (2, 90, 2), conf_out.shape
    assert bool(jnp.all(jnp.isfinite(loc_out))) and bool(jnp.all(jnp.isfinite(conf_out)))
    print("KERNEL_OK")
</pallas_src>

<mosaic_0001>
module attributes {stable_mosaic.version = 11 : i64} {
  func.func @_matmul_bias_kernel(%arg0: i32, %arg1: i32, %arg2: i32, %arg3: memref<512x128xbf16, #tpu.memory_space<vmem>>, %arg4: memref<128x128xbf16, #tpu.memory_space<vmem>>, %arg5: memref<1x128xf32, #tpu.memory_space<vmem>>, %arg6: memref<512x128xbf16, #tpu.memory_space<vmem>>, %arg7: memref<512x128xf32, #tpu.memory_space<vmem>>) attributes {dimension_semantics = [#tpu.dimension_semantics<parallel>, #tpu.dimension_semantics<parallel>, #tpu.dimension_semantics<arbitrary>], iteration_bounds = array<i64: 4, 1, 1>, scalar_prefetch = 0 : i64, scratch_operands = 1 : i64, tpu.core_type = #tpu.core_type<tc>, window_params = [{transform_indices = @transform_0, window_bounds = array<i64: 512, 128>}, {transform_indices = @transform_1, window_bounds = array<i64: 128, 128>}, {transform_indices = @transform_2, window_bounds = array<i64: 1, 128>}, {transform_indices = @transform_3, window_bounds = array<i64: 512, 128>}]} {
    %c0_i32 = arith.constant 0 : i32
    %0 = arith.cmpi eq, %arg2, %c0_i32 : i32
    %1 = arith.extui %0 : i1 to i32
    %c0_i32_0 = arith.constant 0 : i32
    %2 = arith.cmpi ne, %1, %c0_i32_0 : i32
    scf.if %2 {
      %cst_10 = arith.constant 0.000000e+00 : f32
      %12 = vector.broadcast %cst_10 : f32 to vector<512x128xf32>
      %c0_11 = arith.constant 0 : index
      %c0_12 = arith.constant 0 : index
      %13 = vector.load %arg7[%c0_11, %c0_12] : memref<512x128xf32, #tpu.memory_space<vmem>>, vector<512x128xf32>
      tpu.vector_store %arg7[%c0_11, %c0_12], %12 {strides = array<i32>} : memref<512x128xf32, #tpu.memory_space<vmem>>, vector<512x128xf32>,
    } else {
    }
    %c0 = arith.constant 0 : index
    %c0_1 = arith.constant 0 : index
    %3 = vector.load %arg7[%c0, %c0_1] : memref<512x128xf32, #tpu.memory_space<vmem>>, vector<512x128xf32>
    %c0_2 = arith.constant 0 : index
    %c0_3 = arith.constant 0 : index
    %4 = vector.load %arg3[%c0_2, %c0_3] : memref<512x128xbf16, #tpu.memory_space<vmem>>, vector<512x128xbf16>
    %c0_4 = arith.constant 0 : index
    %c0_5 = arith.constant 0 : index
    %5 = vector.load %arg4[%c0_4, %c0_5] : memref<128x128xbf16, #tpu.memory_space<vmem>>, vector<128x128xbf16>
    %cst = arith.constant dense<0.000000e+00> : vector<512x128xf32>
    %6 = tpu.matmul %4, %5, %cst {dimension_numbers = #tpu.dot_dimension_numbers<[1], [0], [0], [1], [0, 0, 1, 1], [], []>} : vector<512x128xbf16>, vector<128x128xbf16>, vector<512x128xf32> -> vector<512x128xf32>
    %7 = arith.addf %3, %6 : vector<512x128xf32>
    %c0_6 = arith.constant 0 : index
    %c0_7 = arith.constant 0 : index
    %8 = vector.load %arg7[%c0_6, %c0_7] : memref<512x128xf32, #tpu.memory_space<vmem>>, vector<512x128xf32>
    tpu.vector_store %arg7[%c0_6, %c0_7], %7 {strides = array<i32>} : memref<512x128xf32, #tpu.memory_space<vmem>>, vector<512x128xf32>,
    %c0_i32_8 = arith.constant 0 : i32
    %9 = arith.cmpi eq, %arg2, %c0_i32_8 : i32
    %10 = arith.extui %9 : i1 to i32
    %c0_i32_9 = arith.constant 0 : i32
    %11 = arith.cmpi ne, %10, %c0_i32_9 : i32
    scf.if %11 {
      %c0_10 = arith.constant 0 : index
      %c0_11 = arith.constant 0 : index
      %12 = vector.load %arg7[%c0_10, %c0_11] : memref<512x128xf32, #tpu.memory_space<vmem>>, vector<512x128xf32>
      %c0_12 = arith.constant 0 : index
      %c0_13 = arith.constant 0 : index
      %13 = vector.load %arg5[%c0_12, %c0_13] : memref<1x128xf32, #tpu.memory_space<vmem>>, vector<1x128xf32>
      %14 = vector.broadcast %13 : vector<1x128xf32> to vector<512x128xf32>
      %15 = arith.addf %12, %14 : vector<512x128xf32>
      %cst_14 = arith.constant 0.000000e+00 : f32
      %16 = vector.broadcast %cst_14 : f32 to vector<512x128xf32>
      %17 = arith.maximumf %15, %16 : vector<512x128xf32>
      %18 = arith.truncf %17 : vector<512x128xf32> to vector<512x128xbf16>
      %c0_15 = arith.constant 0 : index
      %c0_16 = arith.constant 0 : index
      %19 = vector.load %arg6[%c0_15, %c0_16] : memref<512x128xbf16, #tpu.memory_space<vmem>>, vector<512x128xbf16>
      tpu.vector_store %arg6[%c0_15, %c0_16], %18 {strides = array<i32>} : memref<512x128xbf16, #tpu.memory_space<vmem>>, vector<512x128xbf16>,
    } else {
    }
    return
  }
  func.func @transform_0(%arg0: i32, %arg1: i32, %arg2: i32) -> (i32, i32) {
    %c0_i32 = arith.constant 0 : i32
    return %arg0, %arg2 : i32, i32
  }
  func.func @transform_1(%arg0: i32, %arg1: i32, %arg2: i32) -> (i32, i32) {
    %c0_i32 = arith.constant 0 : i32
    return %arg2, %arg1 : i32, i32
  }
  func.func @transform_2(%arg0: i32, %arg1: i32, %arg2: i32) -> (i32, i32) {
    %c0_i32 = arith.constant 0 : i32
    %c0_i32_0 = arith.constant 0 : i32
    return %c0_i32, %arg1 : i32, i32
  }
  func.func @transform_3(%arg0: i32, %arg1: i32, %arg2: i32) -> (i32, i32) {
    %c0_i32 = arith.constant 0 : i32
    return %arg0, %arg1 : i32, i32
  }
}

</mosaic_0001>

<llo_original>
// kernel: tpu_custom_call.1
$region0: #{tpu_custom_call.1}
  #allocation0 [shape = 'u32[]', space=smem, size = 0x4, offset = 0x4, fixed_abs, tag = 'smem constant byte address 0x4 - core index']
  #allocation1 [shape = 'u32[144,128]{1,0:T(1,128)}', space=vmem, size = 0x12000, scoped, tag = 'internal scratch']
  #allocation2 [shape = 'f32[512,128]{1,0:T(8,128)}', space=vmem, size = 0x40000, scoped, tag = 'scratch operand']
  %s0 = inlined_call_operand.hbm [shape: bf16[2048,128], index: 0, kind: input, shape index: {}]
  %s1 = inlined_call_operand.hbm [shape: bf16[128,128], index: 1, kind: input, shape index: {}]
  %s2 = inlined_call_operand.vmem [shape: f32[1,128], index: 2, kind: input, shape index: {}]
  %s3 = inlined_call_operand.hbm [shape: bf16[2048,128], index: 3, kind: output, shape index: {}]
  %s4 = sld [smem:[#allocation0]]
  $region61: #{tpu_custom_call.1} parent=0
    _
  %s6 = ssub.s32 1, %s4
  %s7 = scalar_select 0, %s6, %s4
  $region1: #{tpu_custom_call.1} parent=0
    #allocation3 [shape = 'u8[262144]{0}', space=vmem, size = 0x40000, scoped, tag = 'input window, operand 0']
    #allocation4 [shape = 's32[2]{0}', space=sflag, size = 0x8, scoped, tag = 'scoped memory for tpu_custom_call.1']
    #allocation5 [shape = 's32[2]{0}', space=sflag, size = 0x8, scoped, tag = 'scoped memory for tpu_custom_call.1']
    #allocation6 [shape = 'u8[32768]{0}', space=vmem, size = 0x8000, scoped, tag = 'input window, operand 1, single buffered']
    #allocation7 [shape = 's32[1]{0}', space=sflag, size = 0x4, scoped, tag = 'scoped memory for tpu_custom_call.1']
    #allocation8 [shape = 'u8[262144]{0}', space=vmem, size = 0x40000, scoped, tag = 'output window, operand 0']
    %8 = vsyncpa [#allocation4], 0
    %s9 = scalar_lea.sflag [#allocation4], 1
    %10 = vsyncpa %s9, 0
    %11 = vsyncpa [#allocation7], 0
    %12 = vsyncpa [#allocation5], 0
    %s13 = scalar_lea.sflag [#allocation5], 1
    %14 = vsyncpa %s13, 0
    loop: start=0, step=1, limit=6
    $region2: #{tpu_custom_call.1} parent=1 // loop_pre_header
      _
    $region3: #{tpu_custom_call.1} parent=1 // loop_header
      %s16 = sphi 0, %s20
      %p17 = scmp.ge.s32.totalorder %s16, 6
      %s23 = sphi 0, %s42
      %s24 = sphi 0, %s38
      %s25 = sphi 0, %s34
      %s26 = sphi 0, %s23
      %s27 = sphi 0, %s24
      %s28 = sphi 0, %s25
      %s29 = sphi 0, %s26
      %s30 = sphi 0, %s27
      %s31 = sphi 0, %s28
      %s47 = sphi 0, %s49
      %s50 = sphi 0, %s47
      %s51 = sphi 0, %s50
      %s67 = sphi 0, %s51
      %s75 = sphi 0, %s77
      %s78 = sphi 0, %s75
      %s79 = sphi 0, %s78
      %s95 = sphi 0, %s79
      %s101 = sphi 0, %s103
      %s104 = sphi 0, %s101
      %s105 = sphi 0, %s104
      %s121 = sphi 0, %s105
      %s129 = sphi 0, %s131
      %s132 = sphi 0, %s129
      %s133 = sphi 0, %s132
      %s149 = sphi 0, %s133
    $region4: #{tpu_custom_call.1} parent=1 // loop_header_branch
      %19 = sbr.rel (%p17) target = $region8
    $region5: #{tpu_custom_call.1} parent=1 // loop_body
      %s21 = ssub.s32 %s16, 1
      %s22 = ssub.s32 %s16, 2
      %s32 = sadd.s32 1, %s25
      %p33 = scmp.ge.s32.totalorder %s32, 1
      %s34 = scalar_select %p33, 0, %s32
      %s35 = sadd.s32 1, %s24
      %s36 = scalar_select %p33, %s35, %s24
      %p37 = scmp.ge.s32.totalorder %s36, 1
      %s38 = scalar_select %p37, 0, %s36
      %s39 = sadd.s32 1, %s23
      %s40 = scalar_select %p37, %s39, %s23
      %p41 = scmp.ge.s32.totalorder %s40, 4
      %s42 = scalar_select %p41, 0, %s40
      %s43 = ssub.s32 %s23, %s42
      %s44 = ssub.s32 %s25, %s34
      %s45 = sor.u32 %s43, %s44
      %p46 = scmp.eq.s32.totalorder %s45, 0
      %s48 = sadd.s32 %s47, 1
      %s49 = scalar_select %p46, %s47, %s48
      %p52 = pneg %p46
      %p53 = scmp.eq.s32.totalorder %s16, 3
      %p54 = por %p52, %p53
      %p55 = scmp.ne.s32.totalorder %s47, %s50
      %p56 = scmp.eq.s32.totalorder %s16, 0
      %p57 = por %p55, %p56
      %p58 = scmp.ne.s32.totalorder %s47, %s50
      %p59 = scmp.eq.s32.totalorder %s21, 3
      %p60 = por %p58, %p59
      %p61 = scmp.ne.s32.totalorder %s50, %s51
      %p62 = scmp.eq.s32.totalorder %s21, 0
      %p63 = por %p61, %p62
      %p64 = scmp.ne.s32.totalorder %s50, %s51
      %p65 = scmp.eq.s32.totalorder %s22, 3
      %p66 = por %p64, %p65
      %p68 = scmp.ne.s32.totalorder %s51, %s67
      %p69 = scmp.eq.s32.totalorder %s22, 0
      %p70 = por %p68, %p69
      %s71 = ssub.s32 %s25, %s34
      %s72 = ssub.s32 %s24, %s38
      %s73 = sor.u32 %s71, %s72
      %p74 = scmp.eq.s32.totalorder %s73, 0
      %s76 = sadd.s32 %s75, 1
      %s77 = scalar_select %p74, %s75, %s76
      %p80 = pneg %p74
      %p81 = scmp.eq.s32.totalorder %s16, 3
      %p82 = por %p80, %p81
      %p83 = scmp.ne.s32.totalorder %s75, %s78
      %p84 = scmp.eq.s32.totalorder %s16, 0
      %p85 = por %p83, %p84
      %p86 = scmp.ne.s32.totalorder %s75, %s78
      %p87 = scmp.eq.s32.totalorder %s21, 3
      %p88 = por %p86, %p87
      %p89 = scmp.ne.s32.totalorder %s78, %s79
      %p90 = scmp.eq.s32.totalorder %s21, 0
      %p91 = por %p89, %p90
      %p92 = scmp.ne.s32.totalorder %s78, %s79
      %p93 = scmp.eq.s32.totalorder %s22, 3
      %p94 = por %p92, %p93
      %p96 = scmp.ne.s32.totalorder %s79, %s95
      %p97 = scmp.eq.s32.totalorder %s22, 0
      %p98 = por %p96, %p97
      %s99 = ssub.s32 %s24, %s38
      %p100 = scmp.eq.s32.totalorder %s99, 0
      %s102 = sadd.s32 %s101, 1
      %s103 = scalar_select %p100, %s101, %s102
      %p106 = pneg %p100
      %p107 = scmp.eq.s32.totalorder %s16, 3
      %p108 = por %p106, %p107
      %p109 = scmp.ne.s32.totalorder %s101, %s104
      %p110 = scmp.eq.s32.totalorder %s16, 0
      %p111 = por %p109, %p110
      %p112 = scmp.ne.s32.totalorder %s101, %s104
      %p113 = scmp.eq.s32.totalorder %s21, 3
      %p114 = por %p112, %p113
      %p115 = scmp.ne.s32.totalorder %s104, %s105
      %p116 = scmp.eq.s32.totalorder %s21, 0
      %p117 = por %p115, %p116
      %p118 = scmp.ne.s32.totalorder %s104, %s105
      %p119 = scmp.eq.s32.totalorder %s22, 3
      %p120 = por %p118, %p119
      %p122 = scmp.ne.s32.totalorder %s105, %s121
      %p123 = scmp.eq.s32.totalorder %s22, 0
      %p124 = por %p122, %p123
      %s125 = ssub.s32 %s23, %s42
      %s126 = ssub.s32 %s24, %s38
      %s127 = sor.u32 %s125, %s126
      %p128 = scmp.eq.s32.totalorder %s127, 0
      %s130 = sadd.s32 %s129, 1
      %s131 = scalar_select %p128, %s129, %s130
      %p134 = pneg %p128
      %p135 = scmp.eq.s32.totalorder %s16, 3
      %p136 = por %p134, %p135
      %p137 = scmp.ne.s32.totalorder %s129, %s132
      %p138 = scmp.eq.s32.totalorder %s16, 0
      %p139 = por %p137, %p138
      %p140 = scmp.ne.s32.totalorder %s129, %s132
      %p141 = scmp.eq.s32.totalorder %s21, 3
      %p142 = por %p140, %p141
      %p143 = scmp.ne.s32.totalorder %s132, %s133
      %p144 = scmp.eq.s32.totalorder %s21, 0
      %p145 = por %p143, %p144
      %p146 = scmp.ne.s32.totalorder %s132, %s133
      %p147 = scmp.eq.s32.totalorder %s22, 3
      %p148 = por %p146, %p147
      %p150 = scmp.ne.s32.totalorder %s133, %s149
      %p151 = scmp.eq.s32.totalorder %s22, 0
      %p152 = por %p150, %p151
      %p153 = scmp.le.s32.totalorder 1, %s16
      %p154 = scmp.lt.s32.totalorder %s16, 5
      %p155 = pnand %p153, %p154
      %p156 = pneg %p155
      // Predicated region
      $region9: #{tpu_custom_call.1} parent=5 // pred_check
        _
      $region10: #{tpu_custom_call.1} parent=5 // pred_check_branch
        %158 = sbr.rel (%p155) target = $region12
      $region11: #{tpu_custom_call.1} parent=5 // pred_region
        %s159 = ssub.s32 %s16, 1
        // Predicated region
        $region13: #{tpu_custom_call.1} parent=11 // pred_check
          %p160 = pneg %p91
        $region14: #{tpu_custom_call.1} parent=11 // pred_check_branch
          %162 = sbr.rel (%p160) target = $region16
        $region15: #{tpu_custom_call.1} parent=11 // pred_region
          %s163 = smul.u32 16, %s28
          %s165 = ssub.s32 1024, 1024
          %166 = vsyncadd [#allocation7], %s165
          %s167 = sadd.s32 %s27, %s163
          %s168 = smul.addr %s167, 64
          %s169 = scalar_lea.hbm %s1, %s168
          %s170 = sshll.u32 [#allocation6], 4
          %s171 = int_to_ptr.vmem [resolvable:$true] %s170
          %176 = dma.hbm_to_vmem [thread:$0]  %s169, 1024, %s171, [#allocation7], 64, 64, 4
        $region16: #{tpu_custom_call.1} parent=11 // pred_fallthru
          _
        // Predicated region
        $region17: #{tpu_custom_call.1} parent=11 // pred_check
          %p177 = pneg %p117
        $region18: #{tpu_custom_call.1} parent=11 // pred_check_branch
          %179 = sbr.rel (%p177) target = $region20
        $region19: #{tpu_custom_call.1} parent=11 // pred_region
          %p180 = scmp.lt.s32.totalorder %s27, 0
          %s181 = scalar_select %p180, %s27, 0
          %s182 = scalar_lea.vmem %s2, %s181
        $region20: #{tpu_custom_call.1} parent=11 // pred_fallthru
          _
      $region12: #{tpu_custom_call.1} parent=5 // pred_fallthru
        _
      %p183 = scmp.lt.s32.totalorder %s16, 4
      // Predicated region
      $region21: #{tpu_custom_call.1} parent=5 // pred_check
        %p184 = pneg %p183
      $region22: #{tpu_custom_call.1} parent=5 // pred_check_branch
        %186 = sbr.rel (%p184) target = $region24
      $region23: #{tpu_custom_call.1} parent=5 // pred_region
        // Predicated region
        $region25: #{tpu_custom_call.1} parent=23 // pred_check
          %p187 = pneg %p57
        $region26: #{tpu_custom_call.1} parent=23 // pred_check_branch
          %189 = sbr.rel (%p187) target = $region28
        $region27: #{tpu_custom_call.1} parent=23 // pred_region
          %s190 = sand.u32 %s47, 1
          %s191 = scalar_lea.sflag [#allocation4], %s190
          %s192 = sand.u32 %s47, 1
          %s193 = smul.addr %s192, 256
          %s194 = scalar_lea.vmem [#allocation3], %s193
          %s195 = smul.u32 64, %s23
          %s197 = ssub.s32 4096, 4096
          %198 = vsyncadd %s191, %s197
          %s199 = sadd.s32 %s25, %s195
          %s200 = smul.addr %s199, 64
          %s201 = scalar_lea.hbm %s0, %s200
          %s202 = sshll.u32 %s194, 4
          %s203 = int_to_ptr.vmem [resolvable:$true] %s202
          %208 = dma.hbm_to_vmem [thread:$0]  %s201, 4096, %s203, %s191, 64, 64, 4
        $region28: #{tpu_custom_call.1} parent=23 // pred_fallthru
          _
      $region24: #{tpu_custom_call.1} parent=5 // pred_fallthru
        _
      %p209 = scmp.le.s32.totalorder 1, %s16
      %p210 = scmp.lt.s32.totalorder %s16, 5
      %p211 = pnand %p209, %p210
      %p212 = pneg %p211
      // Predicated region
      $region29: #{tpu_custom_call.1} parent=5 // pred_check
        _
      $region30: #{tpu_custom_call.1} parent=5 // pred_check_branch
        %214 = sbr.rel (%p211) target = $region32
      $region31: #{tpu_custom_call.1} parent=5 // pred_region
        %s215 = ssub.s32 %s16, 1
        %s216 = sand.u32 %s50, 1
        %s217 = scalar_lea.sflag [#allocation4], %s216
        %s218 = sand.u32 %s50, 1
        %s219 = smul.addr %s218, 256
        %s220 = scalar_lea.vmem [#allocation3], %s219
        // Predicated region
        $region33: #{tpu_custom_call.1} parent=31 // pred_check
          %p221 = pneg %p63
        $region34: #{tpu_custom_call.1} parent=31 // pred_check_branch
          %223 = sbr.rel (%p221) target = $region36
        $region35: #{tpu_custom_call.1} parent=31 // pred_region
          %224 = dma.done %s217, 4096
        $region36: #{tpu_custom_call.1} parent=31 // pred_fallthru
          _
        // Predicated region
        $region37: #{tpu_custom_call.1} parent=31 // pred_check
          %p225 = pneg %p91
        $region38: #{tpu_custom_call.1} parent=31 // pred_check_branch
          %227 = sbr.rel (%p225) target = $region40
        $region39: #{tpu_custom_call.1} parent=31 // pred_region
          %228 = dma.done [#allocation7], 1024
        $region40: #{tpu_custom_call.1} parent=31 // pred_fallthru
          _
        %s229 = sand.u32 %s50, 1
        %s230 = scalar_lea.sflag [#allocation4], %s229
        %s231 = sand.u32 %s50, 1
        %s232 = smul.addr %s231, 256
        %s233 = scalar_lea.vmem [#allocation3], %s232
        %p234 = pneg %p63
        %p235 = pneg %p60
        %p236 = pneg %p91
        %p237 = pneg %p88
        %p238 = scmp.lt.s32.totalorder %s27, 0
        %s239 = scalar_select %p238, %s27, 0
        %s240 = scalar_lea.vmem %s2, %s239
        %p241 = pneg %p117
        %p242 = pneg %p114
        %p243 = pneg %p145
        %p244 = pneg %p142
        %s245 = sand.u32 %s132, 1
        %s246 = scalar_lea.sflag [#allocation5], %s245
        %s247 = sand.u32 %s132, 1
        %s248 = smul.addr %s247, 256
        %s249 = scalar_lea.vmem [#allocation8], %s248
        %s250 = smul.u32 64, %s26
        %s251 = smul.u32 16, %s28
        %p252 = scmp.lt.s32.totalorder %s27, 0
        %s253 = scalar_select %p252, %s27, 0
        %s254 = scalar_lea.vmem %s2, %s253
        %s255 = smul.u32 64, %s26
        %p257 = scmp.eq.s32.totalorder %s28, 0
        // Predicated region
        $region41: #{tpu_custom_call.1} parent=31 // pred_check
          %p258 = pneg %p257
        $region42: #{tpu_custom_call.1} parent=31 // pred_check_branch
          %260 = sbr.rel (%p258) target = $region44
        $region43: #{tpu_custom_call.1} parent=31 // pred_region
          %261 = vst [vmem:[#allocation2] sm:$0xff] 0.0
          %262 = vst [vmem:[#allocation2 + $0x8] sm:$0xff] 0.0
          %263 = vst [vmem:[#allocation2 + $0x10] sm:$0xff] 0.0
          %264 = vst [vmem:[#allocation2 + $0x18] sm:$0xff] 0.0
          %265 = vst [vmem:[#allocation2 + $0x20] sm:$0xff] 0.0
          %266 = vst [vmem:[#allocation2 + $0x28] sm:$0xff] 0.0
          %267 = vst [vmem:[#allocation2 + $0x30] sm:$0xff] 0.0
          %268 = vst [vmem:[#allocation2 + $0x38] sm:$0xff] 0.0
          %269 = vst [vmem:[#allocation2 + $0x40] sm:$0xff] 0.0
          %270 = vst [vmem:[#allocation2 + $0x48] sm:$0xff] 0.0
          %271 = vst [vmem:[#allocation2 + $0x50] sm:$0xff] 0.0
          %272 = vst [vmem:[#allocation2 + $0x58] sm:$0xff] 0.0
          %273 = vst [vmem:[#allocation2 + $0x60] sm:$0xff] 0.0
          %274 = vst [vmem:[#allocation2 + $0x68] sm:$0xff] 0.0
          %275 = vst [vmem:[#allocation2 + $0x70] sm:$0xff] 0.0
          %276 = vst [vmem:[#allocation2 + $0x78] sm:$0xff] 0.0
          %277 = vst [vmem:[#allocation2 + $0x80] sm:$0xff] 0.0
          %278 = vst [vmem:[#allocation2 + $0x88] sm:$0xff] 0.0
          %279 = vst [vmem:[#allocation2 + $0x90] sm:$0xff] 0.0
          %280 = vst [vmem:[#allocation2 + $0x98] sm:$0xff] 0.0
          %281 = vst [vmem:[#allocation2 + $0xa0] sm:$0xff] 0.0
          %282 = vst [vmem:[#allocation2 + $0xa8] sm:$0xff] 0.0
          %283 = vst [vmem:[#allocation2 + $0xb0] sm:$0xff] 0.0
          %284 = vst [vmem:[#allocation2 + $0xb8] sm:$0xff] 0.0
          %285 = vst [vmem:[#allocation2 + $0xc0] sm:$0xff] 0.0
          %286 = vst [vmem:[#allocation2 + $0xc8] sm:$0xff] 0.0
          %287 = vst [vmem:[#allocation2 + $0xd0] sm:$0xff] 0.0
          %288 = vst [vmem:[#allocation2 + $0xd8] sm:$0xff] 0.0
          %289 = vst [vmem:[#allocation2 + $0xe0] sm:$0xff] 0.0
          %290 = vst [vmem:[#allocation2 + $0xe8] sm:$0xff] 0.0
          %291 = vst [vmem:[#allocation2 + $0xf0] sm:$0xff] 0.0
          %292 = vst [vmem:[#allocation2 + $0xf8] sm:$0xff] 0.0
          %293 = vst [vmem:[#allocation2 + $0x100] sm:$0xff] 0.0
          %294 = vst [vmem:[#allocation2 + $0x108] sm:$0xff] 0.0
          %295 = vst [vmem:[#allocation2 + $0x110] sm:$0xff] 0.0
          %296 = vst [vmem:[#allocation2 + $0x118] sm:$0xff] 0.0
          %297 = vst [vmem:[#allocation2 + $0x120] sm:$0xff] 0.0
          %298 = vst [vmem:[#allocation2 + $0x128] sm:$0xff] 0.0
          %299 = vst [vmem:[#allocation2 + $0x130] sm:$0xff] 0.0
          %300 = vst [vmem:[#allocation2 + $0x138] sm:$0xff] 0.0
          %301 = vst [vmem:[#allocation2 + $0x140] sm:$0xff] 0.0
          %302 = vst [vmem:[#allocation2 + $0x148] sm:$0xff] 0.0
          %303 = vst [vmem:[#allocation2 + $0x150] sm:$0xff] 0.0
          %304 = vst [vmem:[#allocation2 + $0x158] sm:$0xff] 0.0
          %305 = vst [vmem:[#allocation2 + $0x160] sm:$0xff] 0.0
          %306 = vst [vmem:[#allocation2 + $0x168] sm:$0xff] 0.0
          %307 = vst [vmem:[#allocation2 + $0x170] sm:$0xff] 0.0
          %308 = vst [vmem:[#allocation2 + $0x178] sm:$0xff] 0.0
          %309 = vst [vmem:[#allocation2 + $0x180] sm:$0xff] 0.0
          %310 = vst [vmem:[#allocation2 + $0x188] sm:$0xff] 0.0
          %311 = vst [vmem:[#allocation2 + $0x190] sm:$0xff] 0.0
          %312 = vst [vmem:[#allocation2 + $0x198] sm:$0xff] 0.0
          %313 = vst [vmem:[#allocation2 + $0x1a0] sm:$0xff] 0.0
          %314 = vst [vmem:[#allocation2 + $0x1a8] sm:$0xff] 0.0
          %315 = vst [vmem:[#allocation2 + $0x1b0] sm:$0xff] 0.0
          %316 = vst [vmem:[#allocation2 + $0x1b8] sm:$0xff] 0.0
          %317 = vst [vmem:[#allocation2 + $0x1c0] sm:$0xff] 0.0
          %318 = vst [vmem:[#allocation2 + $0x1c8] sm:$0xff] 0.0
          %319 = vst [vmem:[#allocation2 + $0x1d0] sm:$0xff] 0.0
          %320 = vst [vmem:[#allocation2 + $0x1d8] sm:$0xff] 0.0
          %321 = vst [vmem:[#allocation2 + $0x1e0] sm:$0xff] 0.0
          %322 = vst [vmem:[#allocation2 + $0x1e8] sm:$0xff] 0.0
          %323 = vst [vmem:[#allocation2 + $0x1f0] sm:$0xff] 0.0
          %324 = vst [vmem:[#allocation2 + $0x1f8] sm:$0xff] 0.0
        $region44: #{tpu_custom_call.1} parent=31 // pred_fallthru
          _
        %v325 = vld [vmem:[#allocation2] sm:$0xff]
        %v326 = vld [vmem:[#allocation2 + $0x8] sm:$0xff]
        %v327 = vld [vmem:[#allocation2 + $0x10] sm:$0xff]
        %v328 = vld [vmem:[#allocation2 + $0x18] sm:$0xff]
        %v329 = vld [vmem:[#allocation2 + $0x20] sm:$0xff]
        %v330 = vld [vmem:[#allocation2 + $0x28] sm:$0xff]
        %v331 = vld [vmem:[#allocation2 + $0x30] sm:$0xff]
        %v332 = vld [vmem:[#allocation2 + $0x38] sm:$0xff]
        %v333 = vld [vmem:[#allocation2 + $0x40] sm:$0xff]
        %v334 = vld [vmem:[#allocation2 + $0x48] sm:$0xff]
        %v335 = vld [vmem:[#allocation2 + $0x50] sm:$0xff]
        %v336 = vld [vmem:[#allocation2 + $0x58] sm:$0xff]
        %v337 = vld [vmem:[#allocation2 + $0x60] sm:$0xff]
        %v338 = vld [vmem:[#allocation2 + $0x68] sm:$0xff]
        %v339 = vld [vmem:[#allocation2 + $0x70] sm:$0xff]
        %v340 = vld [vmem:[#allocation2 + $0x78] sm:$0xff]
        %v341 = vld [vmem:[#allocation2 + $0x80] sm:$0xff]
        %v342 = vld [vmem:[#allocation2 + $0x88] sm:$0xff]
        %v343 = vld [vmem:[#allocation2 + $0x90] sm:$0xff]
        %v344 = vld [vmem:[#allocation2 + $0x98] sm:$0xff]
        %v345 = vld [vmem:[#allocation2 + $0xa0] sm:$0xff]
        %v346 = vld [vmem:[#allocation2 + $0xa8] sm:$0xff]
        %v347 = vld [vmem:[#allocation2 + $0xb0] sm:$0xff]
        %v348 = vld [vmem:[#allocation2 + $0xb8] sm:$0xff]
        %v349 = vld [vmem:[#allocation2 + $0xc0] sm:$0xff]
        %v350 = vld [vmem:[#allocation2 + $0xc8] sm:$0xff]
        %v351 = vld [vmem:[#allocation2 + $0xd0] sm:$0xff]
        %v352 = vld [vmem:[#allocation2 + $0xd8] sm:$0xff]
        %v353 = vld [vmem:[#allocation2 + $0xe0] sm:$0xff]
        %v354 = vld [vmem:[#allocation2 + $0xe8] sm:$0xff]
        %v355 = vld [vmem:[#allocation2 + $0xf0] sm:$0xff]
        %v356 = vld [vmem:[#allocation2 + $0xf8] sm:$0xff]
        %v357 = vld [vmem:[#allocation2 + $0x100] sm:$0xff]
        %v358 = vld [vmem:[#allocation2 + $0x108] sm:$0xff]
        %v359 = vld [vmem:[#allocation2 + $0x110] sm:$0xff]
        %v360 = vld [vmem:[#allocation2 + $0x118] sm:$0xff]
        %v361 = vld [vmem:[#allocation2 + $0x120] sm:$0xff]
        %v362 = vld [vmem:[#allocation2 + $0x128] sm:$0xff]
        %v363 = vld [vmem:[#allocation2 + $0x130] sm:$0xff]
        %v364 = vld [vmem:[#allocation2 + $0x138] sm:$0xff]
        %v365 = vld [vmem:[#allocation2 + $0x140] sm:$0xff]
        %v366 = vld [vmem:[#allocation2 + $0x148] sm:$0xff]
        %v367 = vld [vmem:[#allocation2 + $0x150] sm:$0xff]
        %v368 = vld [vmem:[#allocation2 + $0x158] sm:$0xff]
        %v369 = vld [vmem:[#allocation2 + $0x160] sm:$0xff]
        %v370 = vld [vmem:[#allocation2 + $0x168] sm:$0xff]
        %v371 = vld [vmem:[#allocation2 + $0x170] sm:$0xff]
        %v372 = vld [vmem:[#allocation2 + $0x178] sm:$0xff]
        %v373 = vld [vmem:[#allocation2 + $0x180] sm:$0xff]
        %v374 = vld [vmem:[#allocation2 + $0x188] sm:$0xff]
        %v375 = vld [vmem:[#allocation2 + $0x190] sm:$0xff]
        %v376 = vld [vmem:[#allocation2 + $0x198] sm:$0xff]
        %v377 = vld [vmem:[#allocation2 + $0x1a0] sm:$0xff]
        %v378 = vld [vmem:[#allocation2 + $0x1a8] sm:$0xff]
        %v379 = vld [vmem:[#allocation2 + $0x1b0] sm:$0xff]
        %v380 = vld [vmem:[#allocation2 + $0x1b8] sm:$0xff]
        %v381 = vld [vmem:[#allocation2 + $0x1c0] sm:$0xff]
        %v382 = vld [vmem:[#allocation2 + $0x1c8] sm:$0xff]
        %v383 = vld [vmem:[#allocation2 + $0x1d0] sm:$0xff]
        %v384 = vld [vmem:[#allocation2 + $0x1d8] sm:$0xff]
        %v385 = vld [vmem:[#allocation2 + $0x1e0] sm:$0xff]
        %v386 = vld [vmem:[#allocation2 + $0x1e8] sm:$0xff]
        %v387 = vld [vmem:[#allocation2 + $0x1f0] sm:$0xff]
        %v388 = vld [vmem:[#allocation2 + $0x1f8] sm:$0xff]
        %v389 = vld [vmem:[%s220] sm:$0xf]
        %v390 = vld [vmem:[%s220 + $0x4] sm:$0xf]
        %v391 = vld [vmem:[%s220 + $0x8] sm:$0xf]
        %v392 = vld [vmem:[%s220 + $0xc] sm:$0xf]
        %v393 = vld [vmem:[%s220 + $0x10] sm:$0xf]
        %v394 = vld [vmem:[%s220 + $0x14] sm:$0xf]
        %v395 = vld [vmem:[%s220 + $0x18] sm:$0xf]
        %v396 = vld [vmem:[%s220 + $0x1c] sm:$0xf]
        %v397 = vld [vmem:[%s220 + $0x20] sm:$0xf]
        %v398 = vld [vmem:[%s220 + $0x24] sm:$0xf]
        %v399 = vld [vmem:[%s220 + $0x28] sm:$0xf]
        %v400 = vld [vmem:[%s220 + $0x2c] sm:$0xf]
        %v401 = vld [vmem:[%s220 + $0x30] sm:$0xf]
        %v402 = vld [vmem:[%s220 + $0x34] sm:$0xf]
        %v403 = vld [vmem:[%s220 + $0x38] sm:$0xf]
        %v404 = vld [vmem:[%s220 + $0x3c] sm:$0xf]
        %v405 = vld [vmem:[%s220 + $0x40] sm:$0xf]
        %v406 = vld [vmem:[%s220 + $0x44] sm:$0xf]
        %v407 = vld [vmem:[%s220 + $0x48] sm:$0xf]
        %v408 = vld [vmem:[%s220 + $0x4c] sm:$0xf]
        %v409 = vld [vmem:[%s220 + $0x50] sm:$0xf]
        %v410 = vld [vmem:[%s220 + $0x54] sm:$0xf]
        %v411 = vld [vmem:[%s220 + $0x58] sm:$0xf]
        %v412 = vld [vmem:[%s220 + $0x5c] sm:$0xf]
        %v413 = vld [vmem:[%s220 + $0x60] sm:$0xf]
        %v414 = vld [vmem:[%s220 + $0x64] sm:$0xf]
        %v415 = vld [vmem:[%s220 + $0x68] sm:$0xf]
        %v416 = vld [vmem:[%s220 + $0x6c] sm:$0xf]
        %v417 = vld [vmem:[%s220 + $0x70] sm:$0xf]
        %v418 = vld [vmem:[%s220 + $0x74] sm:$0xf]
        %v419 = vld [vmem:[%s220 + $0x78] sm:$0xf]
        %v420 = vld [vmem:[%s220 + $0x7c] sm:$0xf]
        %v421 = vld [vmem:[%s220 + $0x80] sm:$0xf]
        %v422 = vld [vmem:[%s220 + $0x84] sm:$0xf]
        %v423 = vld [vmem:[%s220 + $0x88] sm:$0xf]
        %v424 = vld [vmem:[%s220 + $0x8c] sm:$0xf]
        %v425 = vld [vmem:[%s220 + $0x90] sm:$0xf]
        %v426 = vld [vmem:[%s220 + $0x94] sm:$0xf]
        %v427 = vld [vmem:[%s220 + $0x98] sm:$0xf]
        %v428 = vld [vmem:[%s220 + $0x9c] sm:$0xf]
        %v429 = vld [vmem:[%s220 + $0xa0] sm:$0xf]
        %v430 = vld [vmem:[%s220 + $0xa4] sm:$0xf]
        %v431 = vld [vmem:[%s220 + $0xa8] sm:$0xf]
        %v432 = vld [vmem:[%s220 + $0xac] sm:$0xf]
        %v433 = vld [vmem:[%s220 + $0xb0] sm:$0xf]
        %v434 = vld [vmem:[%s220 + $0xb4] sm:$0xf]
        %v435 = vld [vmem:[%s220 + $0xb8] sm:$0xf]
        %v436 = vld [vmem:[%s220 + $0xbc] sm:$0xf]
        %v437 = vld [vmem:[%s220 + $0xc0] sm:$0xf]
        %v438 = vld [vmem:[%s220 + $0xc4] sm:$0xf]
        %v439 = vld [vmem:[%s220 + $0xc8] sm:$0xf]
        %v440 = vld [vmem:[%s220 + $0xcc] sm:$0xf]
        %v441 = vld [vmem:[%s220 + $0xd0] sm:$0xf]
        %v442 = vld [vmem:[%s220 + $0xd4] sm:$0xf]
        %v443 = vld [vmem:[%s220 + $0xd8] sm:$0xf]
        %v444 = vld [vmem:[%s220 + $0xdc] sm:$0xf]
        %v445 = vld [vmem:[%s220 + $0xe0] sm:$0xf]
        %v446 = vld [vmem:[%s220 + $0xe4] sm:$0xf]
        %v447 = vld [vmem:[%s220 + $0xe8] sm:$0xf]
        %v448 = vld [vmem:[%s220 + $0xec] sm:$0xf]
        %v449 = vld [vmem:[%s220 + $0xf0] sm:$0xf]
        %v450 = vld [vmem:[%s220 + $0xf4] sm:$0xf]
        %v451 = vld [vmem:[%s220 + $0xf8] sm:$0xf]
        %v452 = vld [vmem:[%s220 + $0xfc] sm:$0xf]
        %v453 = vld [vmem:[#allocation6] sm:$0xf]
        %v454 = vld [vmem:[#allocation6 + $0x4] sm:$0xf]
        %v455 = vld [vmem:[#allocation6 + $0x8] sm:$0xf]
        %v456 = vld [vmem:[#allocation6 + $0xc] sm:$0xf]
        %v457 = vld [vmem:[#allocation6 + $0x10] sm:$0xf]
        %v458 = vld [vmem:[#allocation6 + $0x14] sm:$0xf]
        %v459 = vld [vmem:[#allocation6 + $0x18] sm:$0xf]
        %v460 = vld [vmem:[#allocation6 + $0x1c] sm:$0xf]
        %v461 = vld [vmem:[#allocation6 + $0x20] sm:$0xf]
        %v462 = vld [vmem:[#allocation6 + $0x24] sm:$0xf]
        %v463 = vld [vmem:[#allocation6 + $0x28] sm:$0xf]
        %v464 = vld [vmem:[#allocation6 + $0x2c] sm:$0xf]
        %v465 = vld [vmem:[#allocation6 + $0x30] sm:$0xf]
        %v466 = vld [vmem:[#allocation6 + $0x34] sm:$0xf]
        %v467 = vld [vmem:[#allocation6 + $0x38] sm:$0xf]
        %v468 = vld [vmem:[#allocation6 + $0x3c] sm:$0xf]
        %v533 = vunpack.c.l.b16 %v389
        %v534 = vunpack.c.l.b16 %v390
        %v535 = vunpack.c.l.b16 %v391
        %v536 = vunpack.c.l.b16 %v392
        %v537 = vunpack.c.l.b16 %v393
        %v538 = vunpack.c.l.b16 %v394
        %v539 = vunpack.c.l.b16 %v395
        %v540 = vunpack.c.l.b16 %v396
        %v541 = vunpack.c.l.b16 %v397
        %v542 = vunpack.c.l.b16 %v398
        %v543 = vunpack.c.l.b16 %v399
        %v544 = vunpack.c.l.b16 %v400
        %v545 = vunpack.c.l.b16 %v401
        %v546 = vunpack.c.l.b16 %v402
        %v547 = vunpack.c.l.b16 %v403
        %v548 = vunpack.c.l.b16 %v404
        %v549 = vunpack.c.l.b16 %v405
        %v550 = vunpack.c.l.b16 %v406
        %v551 = vunpack.c.l.b16 %v407
        %v552 = vunpack.c.l.b16 %v408
        %v553 = vunpack.c.l.b16 %v409
        %v554 = vunpack.c.l.b16 %v410
        %v555 = vunpack.c.l.b16 %v411
        %v556 = vunpack.c.l.b16 %v412
        %v557 = vunpack.c.l.b16 %v413
        %v558 = vunpack.c.l.b16 %v414
        %v559 = vunpack.c.l.b16 %v415
        %v560 = vunpack.c.l.b16 %v416
        %v561 = vunpack.c.l.b16 %v417
        %v562 = vunpack.c.l.b16 %v418
        %v563 = vunpack.c.l.b16 %v419
        %v564 = vunpack.c.l.b16 %v420
        %v565 = vunpack.c.l.b16 %v421
        %v566 = vunpack.c.l.b16 %v422
        %v567 = vunpack.c.l.b16 %v423
        %v568 = vunpack.c.l.b16 %v424
        %v569 = vunpack.c.l.b16 %v425
        %v570 = vunpack.c.l.b16 %v426
        %v571 = vunpack.c.l.b16 %v427
        %v572 = vunpack.c.l.b16 %v428
        %v573 = vunpack.c.l.b16 %v429
        %v574 = vunpack.c.l.b16 %v430
        %v575 = vunpack.c.l.b16 %v431
        %v576 = vunpack.c.l.b16 %v432
        %v577 = vunpack.c.l.b16 %v433
        %v578 = vunpack.c.l.b16 %v434
        %v579 = vunpack.c.l.b16 %v435
        %v580 = vunpack.c.l.b16 %v436
        %v581 = vunpack.c.l.b16 %v437
        %v582 = vunpack.c.l.b16 %v438
        %v583 = vunpack.c.l.b16 %v439
        %v584 = vunpack.c.l.b16 %v440
        %v585 = vunpack.c.l.b16 %v441
        %v586 = vunpack.c.l.b16 %v442
        %v587 = vunpack.c.l.b16 %v443
        %v588 = vunpack.c.l.b16 %v444
        %v589 = vunpack.c.l.b16 %v445
        %v590 = vunpack.c.l.b16 %v446
        %v591 = vunpack.c.l.b16 %v447
        %v592 = vunpack.c.l.b16 %v448
        %v593 = vunpack.c.l.b16 %v449
        %v594 = vunpack.c.l.b16 %v450
        %v595 = vunpack.c.l.b16 %v451
        %v596 = vunpack.c.l.b16 %v452
        %v597 = vpack.c.b16 %v534, %v533
        %v598 = vpack.c.b16 %v536, %v535
        %v599 = vpack.c.b16 %v538, %v537
        %v600 = vpack.c.b16 %v540, %v539
        %v601 = vpack.c.b16 %v542, %v541
        %v602 = vpack.c.b16 %v544, %v543
        %v603 = vpack.c.b16 %v546, %v545
        %v604 = vpack.c.b16 %v548, %v547
        %v605 = vpack.c.b16 %v550, %v549
        %v606 = vpack.c.b16 %v552, %v551
        %v607 = vpack.c.b16 %v554, %v553
        %v608 = vpack.c.b16 %v556, %v555
        %v609 = vpack.c.b16 %v558, %v557
        %v610 = vpack.c.b16 %v560, %v559
        %v611 = vpack.c.b16 %v562, %v561
        %v612 = vpack.c.b16 %v564, %v563
        %v613 = vpack.c.b16 %v566, %v565
        %v614 = vpack.c.b16 %v568, %v567
        %v615 = vpack.c.b16 %v570, %v569
        %v616 = vpack.c.b16 %v572, %v571
        %v617 = vpack.c.b16 %v574, %v573
        %v618 = vpack.c.b16 %v576, %v575
        %v619 = vpack.c.b16 %v578, %v577
        %v620 = vpack.c.b16 %v580, %v579
        %v621 = vpack.c.b16 %v582, %v581
        %v622 = vpack.c.b16 %v584, %v583
        %v623 = vpack.c.b16 %v586, %v585
        %v624 = vpack.c.b16 %v588, %v587
        %v625 = vpack.c.b16 %v590, %v589
        %v626 = vpack.c.b16 %v592, %v591
        %v627 = vpack.c.b16 %v594, %v593
        %v628 = vpack.c.b16 %v596, %v595
        %v677 = vunpack.c.l.b16 %v453
        %v678 = vunpack.c.l.b16 %v454
        %v679 = vunpack.c.l.b16 %v455
        %v680 = vunpack.c.l.b16 %v456
        %v681 = vunpack.c.l.b16 %v457
        %v682 = vunpack.c.l.b16 %v458
        %v683 = vunpack.c.l.b16 %v459
        %v684 = vunpack.c.l.b16 %v460
        %v685 = vunpack.c.l.b16 %v461
        %v686 = vunpack.c.l.b16 %v462
        %v687 = vunpack.c.l.b16 %v463
        %v688 = vunpack.c.l.b16 %v464
        %v689 = vunpack.c.l.b16 %v465
        %v690 = vunpack.c.l.b16 %v466
        %v691 = vunpack.c.l.b16 %v467
        %v692 = vunpack.c.l.b16 %v468
        %v693 = vpack.c.b16 %v678, %v677
        %v694 = vpack.c.b16 %v680, %v679
        %v695 = vpack.c.b16 %v682, %v681
        %v696 = vpack.c.b16 %v684, %v683
        %v697 = vpack.c.b16 %v686, %v685
        %v698 = vpack.c.b16 %v688, %v687
        %v699 = vpack.c.b16 %v690, %v689
        %v700 = vpack.c.b16 %v692, %v691
        %709 = vmatprep.subr.bf16.mxu0 0
        %710 = vmatpush1.bf16.msra.mxu0 %v693
        %711 = vmatprep.subr.bf16.mxu0 0
        %712 = vmatpush1.bf16.msra.mxu0 %v694
        %713 = vmatprep.subr.bf16.mxu0 0
        %714 = vmatpush1.bf16.msra.mxu0 %v695
        %715 = vmatprep.subr.bf16.mxu0 0
        %716 = vmatpush1.bf16.msra.mxu0 %v696
        %717 = vmatprep.subr.bf16.mxu0 0
        %718 = vmatpush1.bf16.msra.mxu0 %v697
        %719 = vmatprep.subr.bf16.mxu0 0
        %720 = vmatpush1.bf16.msra.mxu0 %v698
        %721 = vmatprep.subr.bf16.mxu0 0
        %722 = vmatpush1.bf16.msra.mxu0 %v699
        %723 = vmatprep.subr.bf16.mxu0 0
        %724 = vmatpush1.bf16.msra.mxu0 %v700
        %725 = vmatprep.subr.bf16.mxu0 0
        %726 = vmatpush1.bf16.msra.mxu0 0
        %727 = vmatprep.subr.bf16.mxu0 0
        %728 = vmatpush1.bf16.msra.mxu0 0
        %729 = vmatprep.subr.bf16.mxu0 0
        %730 = vmatpush1.bf16.msra.mxu0 0
        %731 = vmatprep.subr.bf16.mxu0 0
        %732 = vmatpush1.bf16.msra.mxu0 0
        %733 = vmatprep.subr.bf16.mxu0 0
        %734 = vmatpush1.bf16.msra.mxu0 0
        %735 = vmatprep.subr.bf16.mxu0 0
        %736 = vmatpush1.bf16.msra.mxu0 0
        %737 = vmatprep.subr.bf16.mxu0 0
        %738 = vmatpush1.bf16.msra.mxu0 0
        %739 = vmatprep.subr.bf16.mxu0 0
        %740 = vmatpush1.bf16.msra.mxu0 0
        %741 = vmatprep.mubr.bf16.mxu0 0
        %742 = vmatmul.mubr.bf16.gmra.mrb[0].mxu0 %v597
        %v743 = vpop.f32.mrb[0].mxu0
        %v744 = vadd.f32 0.0, %v743
        %v745 = vpop.f32.mrb[0].mxu0
        %v746 = vpop.f32.mrb[0].mxu0
        %v747 = vadd.f32 0.0, %v746
        %v748 = vpop.f32.mrb[0].mxu0
        %749 = vmatprep.mubr.bf16.mxu0 0
        %750 = vmatmul.mubr.bf16.gmra.mrb[0].mxu0 %v598
        %v751 = vpop.f32.mrb[0].mxu0
        %v752 = vadd.f32 0.0, %v751
        %v753 = vpop.f32.mrb[0].mxu0
        %v754 = vpop.f32.mrb[0].mxu0
        %v755 = vadd.f32 0.0, %v754
        %v756 = vpop.f32.mrb[0].mxu0
        %757 = vmatprep.mubr.bf16.mxu0 0
        %758 = vmatmul.mubr.bf16.gmra.mrb[0].mxu0 %v599
        %v759 = vpop.f32.mrb[0].mxu0
        %v760 = vadd.f32 0.0, %v759
        %v761 = vpop.f32.mrb[0].mxu0
        %v762 = vpop.f32.mrb[0].mxu0
        %v763 = vadd.f32 0.0, %v762
        %v764 = vpop.f32.mrb[0].mxu0
        %765 = vmatprep.mubr.bf16.mxu0 0
        %766 = vmatmul.mubr.bf16.gmra.mrb[0].mxu0 %v600
        %v767 = vpop.f32.mrb[0].mxu0
        %v768 = vadd.f32 0.0, %v767
        %v769 = vpop.f32.mrb[0].mxu0
        %v770 = vpop.f32.mrb[0].mxu0
        %v771 = vadd.f32 0.0, %v770
        %v772 = vpop.f32.mrb[0].mxu0
        %773 = vmatprep.mubr.bf16.mxu0 0
        %774 = vmatmul.mubr.bf16.gmra.mrb[0].mxu0 %v601
        %v775 = vpop.f32.mrb[0].mxu0
        %v776 = vadd.f32 0.0, %v775
        %v777 = vpop.f32.mrb[0].mxu0
        %v778 = vpop.f32.mrb[0].mxu0
        %v779 = vadd.f32 0.0, %v778
        %v780 = vpop.f32.mrb[0].mxu0
        %781 = vmatprep.mubr.bf16.mxu0 0
        %782 = vmatmul.mubr.bf16.gmra.mrb[0].mxu0 %v602
        %v783 = vpop.f32.mrb[0].mxu0
        %v784 = vadd.f32 0.0, %v783
        %v785 = vpop.f32.mrb[0].mxu0
        %v786 = vpop.f32.mrb[0].mxu0
        %v787 = vadd.f32 0.0, %v786
        %v788 = vpop.f32.mrb[0].mxu0
        %789 = vmatprep.mubr.bf16.mxu0 0
        %790 = vmatmul.mubr.bf16.gmra.mrb[0].mxu0 %v603
        %v791 = vpop.f32.mrb[0].mxu0
        %v792 = vadd.f32 0.0, %v791
        %v793 = vpop.f32.mrb[0].mxu0
        %v794 = vpop.f32.mrb[0].mxu0
        %v795 = vadd.f32 0.0, %v794
        %v796 = vpop.f32.mrb[0].mxu0
        %797 = vmatprep.mubr.bf16.mxu0 0
        %798 = vmatmul.mubr.bf16.gmra.mrb[0].mxu0 %v604
        %v799 = vpop.f32.mrb[0].mxu0
        %v800 = vadd.f32 0.0, %v799
        %v801 = vpop.f32.mrb[0].mxu0
        %v802 = vpop.f32.mrb[0].mxu0
        %v803 = vadd.f32 0.0, %v802
        %v804 = vpop.f32.mrb[0].mxu0
        %805 = vmatprep.mubr.bf16.mxu0 0
        %806 = vmatmul.mubr.bf16.gmra.mrb[0].mxu0 %v605
        %v807 = vpop.f32.mrb[0].mxu0
        %v808 = vadd.f32 0.0, %v807
        %v809 = vpop.f32.mrb[0].mxu0
        %v810 = vpop.f32.mrb[0].mxu0
        %v811 = vadd.f32 0.0, %v810
        %v812 = vpop.f32.mrb[0].mxu0
        %813 = vmatprep.mubr.bf16.mxu0 0
        %814 = vmatmul.mubr.bf16.gmra.mrb[0].mxu0 %v606
        %v815 = vpop.f32.mrb[0].mxu0
        %v816 = vadd.f32 0.0, %v815
        %v817 = vpop.f32.mrb[0].mxu0
        %v818 = vpop.f32.mrb[0].mxu0
        %v819 = vadd.f32 0.0, %v818
        %v820 = vpop.f32.mrb[0].mxu0
        %821 = vmatprep.mubr.bf16.mxu0 0
        %822 = vmatmul.mubr.bf16.gmra.mrb[0].mxu0 %v607
        %v823 = vpop.f32.mrb[0].mxu0
        %v824 = vadd.f32 0.0, %v823
        %v825 = vpop.f32.mrb[0].mxu0
        %v826 = vpop.f32.mrb[0].mxu0
        %v827 = vadd.f32 0.0, %v826
        %v828 = vpop.f32.mrb[0].mxu0
        %829 = vmatprep.mubr.bf16.mxu0 0
        %830 = vmatmul.mubr.bf16.gmra.mrb[0].mxu0 %v608
        %v831 = vpop.f32.mrb[0].mxu0
        %v832 = vadd.f32 0.0, %v831
        %v833 = vpop.f32.mrb[0].mxu0
        %v834 = vpop.f32.mrb[0].mxu0
        %v835 = vadd.f32 0.0, %v834
        %v836 = vpop.f32.mrb[0].mxu0
        %837 = vmatprep.mubr.bf16.mxu0 0
        %838 = vmatmul.mubr.bf16.gmra.mrb[0].mxu0 %v609
        %v839 = vpop.f32.mrb[0].mxu0
        %v840 = vadd.f32 0.0, %v839
        %v841 = vpop.f32.mrb[0].mxu0
        %v842 = vpop.f32.mrb[0].mxu0
        %v843 = vadd.f32 0.0, %v842
        %v844 = vpop.f32.mrb[0].mxu0
        %845 = vmatprep.mubr.bf16.mxu0 0
        %846 = vmatmul.mubr.bf16.gmra.mrb[0].mxu0 %v610
        %v847 = vpop.f32.mrb[0].mxu0
        %v848 = vadd.f32 0.0, %v847
        %v849 = vpop.f32.mrb[0].mxu0
        %v850 = vpop.f32.mrb[0].mxu0
        %v851 = vadd.f32 0.0, %v850
        %v852 = vpop.f32.mrb[0].mxu0
        %853 = vmatprep.mubr.bf16.mxu0 0
        %854 = vmatmul.mubr.bf16.gmra.mrb[0].mxu0 %v611
        %v855 = vpop.f32.mrb[0].mxu0
        %v856 = vadd.f32 0.0, %v855
        %v857 = vpop.f32.mrb[0].mxu0
        %v858 = vpop.f32.mrb[0].mxu0
        %v859 = vadd.f32 0.0, %v858
        %v860 = vpop.f32.mrb[0].mxu0
        %861 = vmatprep.mubr.bf16.mxu0 0
        %862 = vmatmul.mubr.bf16.gmra.mrb[0].mxu0 %v612
        %v863 = vpop.f32.mrb[0].mxu0
        %v864 = vadd.f32 0.0, %v863
        %v865 = vpop.f32.mrb[0].mxu0
        %v866 = vpop.f32.mrb[0].mxu0
        %v867 = vadd.f32 0.0, %v866
        %v868 = vpop.f32.mrb[0].mxu0
        %869 = vmatprep.mubr.bf16.mxu0 0
        %870 = vmatmul.mubr.bf16.gmra.mrb[0].mxu0 %v613
        %v871 = vpop.f32.mrb[0].mxu0
        %v872 = vadd.f32 0.0, %v871
        %v873 = vpop.f32.mrb[0].mxu0
        %v874 = vpop.f32.mrb[0].mxu0
        %v875 = vadd.f32 0.0, %v874
        %v876 = vpop.f32.mrb[0].mxu0
        %877 = vmatprep.mubr.bf16.mxu0 0
        %878 = vmatmul.mubr.bf16.gmra.mrb[0].mxu0 %v614
        %v879 = vpop.f32.mrb[0].mxu0
        %v880 = vadd.f32 0.0, %v879
        %v881 = vpop.f32.mrb[0].mxu0
        %v882 = vpop.f32.mrb[0].mxu0
        %v883 = vadd.f32 0.0, %v882
        %v884 = vpop.f32.mrb[0].mxu0
        %885 = vmatprep.mubr.bf16.mxu0 0
        %886 = vmatmul.mubr.bf16.gmra.mrb[0].mxu0 %v615
        %v887 = vpop.f32.mrb[0].mxu0
        %v888 = vadd.f32 0.0, %v887
        %v889 = vpop.f32.mrb[0].mxu0
        %v890 = vpop.f32.mrb[0].mxu0
        %v891 = vadd.f32 0.0, %v890
        %v892 = vpop.f32.mrb[0].mxu0
        %893 = vmatprep.mubr.bf16.mxu0 0
        %894 = vmatmul.mubr.bf16.gmra.mrb[0].mxu0 %v616
        %v895 = vpop.f32.mrb[0].mxu0
        %v896 = vadd.f32 0.0, %v895
        %v897 = vpop.f32.mrb[0].mxu0
        %v898 = vpop.f32.mrb[0].mxu0
        %v899 = vadd.f32 0.0, %v898
        %v900 = vpop.f32.mrb[0].mxu0
        %901 = vmatprep.mubr.bf16.mxu0 0
        %902 = vmatmul.mubr.bf16.gmra.mrb[0].mxu0 %v617
        %v903 = vpop.f32.mrb[0].mxu0
        %v904 = vadd.f32 0.0, %v903
        %v905 = vpop.f32.mrb[0].mxu0
        %v906 = vpop.f32.mrb[0].mxu0
        %v907 = vadd.f32 0.0, %v906
        %v908 = vpop.f32.mrb[0].mxu0
        %909 = vmatprep.mubr.bf16.mxu0 0
        %910 = vmatmul.mubr.bf16.gmra.mrb[0].mxu0 %v618
        %v911 = vpop.f32.mrb[0].mxu0
        %v912 = vadd.f32 0.0, %v911
        %v913 = vpop.f32.mrb[0].mxu0
        %v914 = vpop.f32.mrb[0].mxu0
        %v915 = vadd.f32 0.0, %v914
        %v916 = vpop.f32.mrb[0].mxu0
        %917 = vmatprep.mubr.bf16.mxu0 0
        %918 = vmatmul.mubr.bf16.gmra.mrb[0].mxu0 %v619
        %v919 = vpop.f32.mrb[0].mxu0
        %v920 = vadd.f32 0.0, %v919
        %v921 = vpop.f32.mrb[0].mxu0
        %v922 = vpop.f32.mrb[0].mxu0
        %v923 = vadd.f32 0.0, %v922
        %v924 = vpop.f32.mrb[0].mxu0
        %925 = vmatprep.mubr.bf16.mxu0 0
        %926 = vmatmul.mubr.bf16.gmra.mrb[0].mxu0 %v620
        %v927 = vpop.f32.mrb[0].mxu0
        %v928 = vadd.f32 0.0, %v927
        %v929 = vpop.f32.mrb[0].mxu0
        %v930 = vpop.f32.mrb[0].mxu0
        %v931 = vadd.f32 0.0, %v930
        %v932 = vpop.f32.mrb[0].mxu0
        %933 = vmatprep.mubr.bf16.mxu0 0
        %934 = vmatmul.mubr.bf16.gmra.mrb[0].mxu0 %v621
        %v935 = vpop.f32.mrb[0].mxu0
        %v936 = vadd.f32 0.0, %v935
        %v937 = vpop.f32.mrb[0].mxu0
        %v938 = vpop.f32.mrb[0].mxu0
        %v939 = vadd.f32 0.0, %v938
        %v940 = vpop.f32.mrb[0].mxu0
        %941 = vmatprep.mubr.bf16.mxu0 0
        %942 = vmatmul.mubr.bf16.gmra.mrb[0].mxu0 %v622
        %v943 = vpop.f32.mrb[0].mxu0
        %v944 = vadd.f32 0.0, %v943
        %v945 = vpop.f32.mrb[0].mxu0
        %v946 = vpop.f32.mrb[0].mxu0
        %v947 = vadd.f32 0.0, %v946
        %v948 = vpop.f32.mrb[0].mxu0
        %949 = vmatprep.mubr.bf16.mxu0 0
        %950 = vmatmul.mubr.bf16.gmra.mrb[0].mxu0 %v623
        %v951 = vpop.f32.mrb[0].mxu0
        %v952 = vadd.f32 0.0, %v951
        %v953 = vpop.f32.mrb[0].mxu0
        %v954 = vpop.f32.mrb[0].mxu0
        %v955 = vadd.f32 0.0, %v954
        %v956 = vpop.f32.mrb[0].mxu0
        %957 = vmatprep.mubr.bf16.mxu0 0
        %958 = vmatmul.mubr.bf16.gmra.mrb[0].mxu0 %v624
        %v959 = vpop.f32.mrb[0].mxu0
        %v960 = vadd.f32 0.0, %v959
        %v961 = vpop.f32.mrb[0].mxu0
        %v962 = vpop.f32.mrb[0].mxu0
        %v963 = vadd.f32 0.0, %v962
        %v964 = vpop.f32.mrb[0].mxu0
        %965 = vmatprep.mubr.bf16.mxu0 0
        %966 = vmatmul.mubr.bf16.gmra.mrb[0].mxu0 %v625
        %v967 = vpop.f32.mrb[0].mxu0
        %v968 = vadd.f32 0.0, %v967
        %v969 = vpop.f32.mrb[0].mxu0
        %v970 = vpop.f32.mrb[0].mxu0
        %v971 = vadd.f32 0.0, %v970
        %v972 = vpop.f32.mrb[0].mxu0
        %973 = vmatprep.mubr.bf16.mxu0 0
        %974 = vmatmul.mubr.bf16.gmra.mrb[0].mxu0 %v626
        %v975 = vpop.f32.mrb[0].mxu0
        %v976 = vadd.f32 0.0, %v975
        %v977 = vpop.f32.mrb[0].mxu0
        %v978 = vpop.f32.mrb[0].mxu0
        %v979 = vadd.f32 0.0, %v978
        %v980 = vpop.f32.mrb[0].mxu0
        %981 = vmatprep.mubr.bf16.mxu0 0
        %982 = vmatmul.mubr.bf16.gmra.mrb[0].mxu0 %v627
        %v983 = vpop.f32.mrb[0].mxu0
        %v984 = vadd.f32 0.0, %v983
        %v985 = vpop.f32.mrb[0].mxu0
        %v986 = vpop.f32.mrb[0].mxu0
        %v987 = vadd.f32 0.0, %v986
        %v988 = vpop.f32.mrb[0].mxu0
        %989 = vmatprep.mubr.bf16.mxu0 0
        %990 = vmatmul.mubr.bf16.gmra.mrb[0].mxu0 %v628
        %v991 = vpop.f32.mrb[0].mxu0
        %v992 = vadd.f32 0.0, %v991
        %v993 = vpop.f32.mrb[0].mxu0
        %v994 = vpop.f32.mrb[0].mxu0
        %v995 = vadd.f32 0.0, %v994
        %v996 = vpop.f32.mrb[0].mxu0
        %997 = vdwg.mxu0
        %v998 = vadd.f32 %v325, %v744
        %v999 = vadd.f32 %v326, %v747
        %v1000 = vadd.f32 %v327, %v752
        %v1001 = vadd.f32 %v328, %v755
        %v1002 = vadd.f32 %v329, %v760
        %v1003 = vadd.f32 %v330, %v763
        %v1004 = vadd.f32 %v331, %v768
        %v1005 = vadd.f32 %v332, %v771
        %v1006 = vadd.f32 %v333, %v776
        %v1007 = vadd.f32 %v334, %v779
        %v1008 = vadd.f32 %v335, %v784
        %v1009 = vadd.f32 %v336, %v787
        %v1010 = vadd.f32 %v337, %v792
        %v1011 = vadd.f32 %v338, %v795
        %v1012 = vadd.f32 %v339, %v800
        %v1013 = vadd.f32 %v340, %v803
        %v1014 = vadd.f32 %v341, %v808
        %v1015 = vadd.f32 %v342, %v811
        %v1016 = vadd.f32 %v343, %v816
        %v1017 = vadd.f32 %v344, %v819
        %v1018 = vadd.f32 %v345, %v824
        %v1019 = vadd.f32 %v346, %v827
        %v1020 = vadd.f32 %v347, %v832
        %v1021 = vadd.f32 %v348, %v835
        %v1022 = vadd.f32 %v349, %v840
        %v1023 = vadd.f32 %v350, %v843
        %v1024 = vadd.f32 %v351, %v848
        %v1025 = vadd.f32 %v352, %v851
        %v1026 = vadd.f32 %v353, %v856
        %v1027 = vadd.f32 %v354, %v859
        %v1028 = vadd.f32 %v355, %v864
        %v1029 = vadd.f32 %v356, %v867
        %v1030 = vadd.f32 %v357, %v872
        %v1031 = vadd.f32 %v358, %v875
        %v1032 = vadd.f32 %v359, %v880
        %v1033 = vadd.f32 %v360, %v883
        %v1034 = vadd.f32 %v361, %v888
        %v1035 = vadd.f32 %v362, %v891
        %v1036 = vadd.f32 %v363, %v896
        %v1037 = vadd.f32 %v364, %v899
        %v1038 = vadd.f32 %v365, %v904
        %v1039 = vadd.f32 %v366, %v907
        %v1040 = vadd.f32 %v367, %v912
        %v1041 = vadd.f32 %v368, %v915
        %v1042 = vadd.f32 %v369, %v920
        %v1043 = vadd.f32 %v370, %v923
        %v1044 = vadd.f32 %v371, %v928
        %v1045 = vadd.f32 %v372, %v931
        %v1046 = vadd.f32 %v373, %v936
        %v1047 = vadd.f32 %v374, %v939
        %v1048 = vadd.f32 %v375, %v944
        %v1049 = vadd.f32 %v376, %v947
        %v1050 = vadd.f32 %v377, %v952
        %v1051 = vadd.f32 %v378, %v955
        %v1052 = vadd.f32 %v379, %v960
        %v1053 = vadd.f32 %v380, %v963
        %v1054 = vadd.f32 %v381, %v968
        %v1055 = vadd.f32 %v382, %v971
        %v1056 = vadd.f32 %v383, %v976
        %v1057 = vadd.f32 %v384, %v979
        %v1058 = vadd.f32 %v385, %v984
        %v1059 = vadd.f32 %v386, %v987
        %v1060 = vadd.f32 %v387, %v992
        %v1061 = vadd.f32 %v388, %v995
        %1062 = vst [vmem:[#allocation2] sm:$0xff] %v998
        %1063 = vst [vmem:[#allocation2 + $0x8] sm:$0xff] %v999
        %1064 = vst [vmem:[#allocation2 + $0x10] sm:$0xff] %v1000
        %1065 = vst [vmem:[#allocation2 + $0x18] sm:$0xff] %v1001
        %1066 = vst [vmem:[#allocation2 + $0x20] sm:$0xff] %v1002
        %1067 = vst [vmem:[#allocation2 + $0x28] sm:$0xff] %v1003
        %1068 = vst [vmem:[#allocation2 + $0x30] sm:$0xff] %v1004
        %1069 = vst [vmem:[#allocation2 + $0x38] sm:$0xff] %v1005
        %1070 = vst [vmem:[#allocation2 + $0x40] sm:$0xff] %v1006
        %1071 = vst [vmem:[#allocation2 + $0x48] sm:$0xff] %v1007
        %1072 = vst [vmem:[#allocation2 + $0x50] sm:$0xff] %v1008
        %1073 = vst [vmem:[#allocation2 + $0x58] sm:$0xff] %v1009
        %1074 = vst [vmem:[#allocation2 + $0x60] sm:$0xff] %v1010
        %1075 = vst [vmem:[#allocation2 + $0x68] sm:$0xff] %v1011
        %1076 = vst [vmem:[#allocation2 + $0x70] sm:$0xff] %v1012
        %1077 = vst [vmem:[#allocation2 + $0x78] sm:$0xff] %v1013
        %1078 = vst [vmem:[#allocation2 + $0x80] sm:$0xff] %v1014
        %1079 = vst [vmem:[#allocation2 + $0x88] sm:$0xff] %v1015
        %1080 = vst [vmem:[#allocation2 + $0x90] sm:$0xff] %v1016
        %1081 = vst [vmem:[#allocation2 + $0x98] sm:$0xff] %v1017
        %1082 = vst [vmem:[#allocation2 + $0xa0] sm:$0xff] %v1018
        %1083 = vst [vmem:[#allocation2 + $0xa8] sm:$0xff] %v1019
        %1084 = vst [vmem:[#allocation2 + $0xb0] sm:$0xff] %v1020
        %1085 = vst [vmem:[#allocation2 + $0xb8] sm:$0xff] %v1021
        %1086 = vst [vmem:[#allocation2 + $0xc0] sm:$0xff] %v1022
        %1087 = vst [vmem:[#allocation2 + $0xc8] sm:$0xff] %v1023
        %1088 = vst [vmem:[#allocation2 + $0xd0] sm:$0xff] %v1024
        %1089 = vst [vmem:[#allocation2 + $0xd8] sm:$0xff] %v1025
        %1090 = vst [vmem:[#allocation2 + $0xe0] sm:$0xff] %v1026
        %1091 = vst [vmem:[#allocation2 + $0xe8] sm:$0xff] %v1027
        %1092 = vst [vmem:[#allocation2 + $0xf0] sm:$0xff] %v1028
        %1093 = vst [vmem:[#allocation2 + $0xf8] sm:$0xff] %v1029
        %1094 = vst [vmem:[#allocation2 + $0x100] sm:$0xff] %v1030
        %1095 = vst [vmem:[#allocation2 + $0x108] sm:$0xff] %v1031
        %1096 = vst [vmem:[#allocation2 + $0x110] sm:$0xff] %v1032
        %1097 = vst [vmem:[#allocation2 + $0x118] sm:$0xff] %v1033
        %1098 = vst [vmem:[#allocation2 + $0x120] sm:$0xff] %v1034
        %1099 = vst [vmem:[#allocation2 + $0x128] sm:$0xff] %v1035
        %1100 = vst [vmem:[#allocation2 + $0x130] sm:$0xff] %v1036
        %1101 = vst [vmem:[#allocation2 + $0x138] sm:$0xff] %v1037
        %1102 = vst [vmem:[#allocation2 + $0x140] sm:$0xff] %v1038
        %1103 = vst [vmem:[#allocation2 + $0x148] sm:$0xff] %v1039
        %1104 = vst [vmem:[#allocation2 + $0x150] sm:$0xff] %v1040
        %1105 = vst [vmem:[#allocation2 + $0x158] sm:$0xff] %v1041
        %1106 = vst [vmem:[#allocation2 + $0x160] sm:$0xff] %v1042
        %1107 = vst [vmem:[#allocation2 + $0x168] sm:$0xff] %v1043
        %1108 = vst [vmem:[#allocation2 + $0x170] sm:$0xff] %v1044
        %1109 = vst [vmem:[#allocation2 + $0x178] sm:$0xff] %v1045
        %1110 = vst [vmem:[#allocation2 + $0x180] sm:$0xff] %v1046
        %1111 = vst [vmem:[#allocation2 + $0x188] sm:$0xff] %v1047
        %1112 = vst [vmem:[#allocation2 + $0x190] sm:$0xff] %v1048
        %1113 = vst [vmem:[#allocation2 + $0x198] sm:$0xff] %v1049
        %1114 = vst [vmem:[#allocation2 + $0x1a0] sm:$0xff] %v1050
        %1115 = vst [vmem:[#allocation2 + $0x1a8] sm:$0xff] %v1051
        %1116 = vst [vmem:[#allocation2 + $0x1b0] sm:$0xff] %v1052
        %1117 = vst [vmem:[#allocation2 + $0x1b8] sm:$0xff] %v1053
        %1118 = vst [vmem:[#allocation2 + $0x1c0] sm:$0xff] %v1054
        %1119 = vst [vmem:[#allocation2 + $0x1c8] sm:$0xff] %v1055
        %1120 = vst [vmem:[#allocation2 + $0x1d0] sm:$0xff] %v1056
        %1121 = vst [vmem:[#allocation2 + $0x1d8] sm:$0xff] %v1057
        %1122 = vst [vmem:[#allocation2 + $0x1e0] sm:$0xff] %v1058
        %1123 = vst [vmem:[#allocation2 + $0x1e8] sm:$0xff] %v1059
        %1124 = vst [vmem:[#allocation2 + $0x1f0] sm:$0xff] %v1060
        %1125 = vst [vmem:[#allocation2 + $0x1f8] sm:$0xff] %v1061
        // Predicated region
        $region45: #{tpu_custom_call.1} parent=31 // pred_check
          %p1126 = pneg %p257
        $region46: #{tpu_custom_call.1} parent=31 // pred_check_branch
          %1128 = sbr.rel (%p1126) target = $region48
        $region47: #{tpu_custom_call.1} parent=31 // pred_region
          %v1129 = vld [vmem:[#allocation2] sm:$0xff]
          %v1130 = vld [vmem:[#allocation2 + $0x8] sm:$0xff]
          %v1131 = vld [vmem:[#allocation2 + $0x10] sm:$0xff]
          %v1132 = vld [vmem:[#allocation2 + $0x18] sm:$0xff]
          %v1133 = vld [vmem:[#allocation2 + $0x20] sm:$0xff]
          %v1134 = vld [vmem:[#allocation2 + $0x28] sm:$0xff]
          %v1135 = vld [vmem:[#allocation2 + $0x30] sm:$0xff]
          %v1136 = vld [vmem:[#allocation2 + $0x38] sm:$0xff]
          %v1137 = vld [vmem:[#allocation2 + $0x40] sm:$0xff]
          %v1138 = vld [vmem:[#allocation2 + $0x48] sm:$0xff]
          %v1139 = vld [vmem:[#allocation2 + $0x50] sm:$0xff]
          %v1140 = vld [vmem:[#allocation2 + $0x58] sm:$0xff]
          %v1141 = vld [vmem:[#allocation2 + $0x60] sm:$0xff]
          %v1142 = vld [vmem:[#allocation2 + $0x68] sm:$0xff]
          %v1143 = vld [vmem:[#allocation2 + $0x70] sm:$0xff]
          %v1144 = vld [vmem:[#allocation2 + $0x78] sm:$0xff]
          %v1145 = vld [vmem:[#allocation2 + $0x80] sm:$0xff]
          %v1146 = vld [vmem:[#allocation2 + $0x88] sm:$0xff]
          %v1147 = vld [vmem:[#allocation2 + $0x90] sm:$0xff]
          %v1148 = vld [vmem:[#allocation2 + $0x98] sm:$0xff]
          %v1149 = vld [vmem:[#allocation2 + $0xa0] sm:$0xff]
          %v1150 = vld [vmem:[#allocation2 + $0xa8] sm:$0xff]
          %v1151 = vld [vmem:[#allocation2 + $0xb0] sm:$0xff]
          %v1152 = vld [vmem:[#allocation2 + $0xb8] sm:$0xff]
          %v1153 = vld [vmem:[#allocation2 + $0xc0] sm:$0xff]
          %v1154 = vld [vmem:[#allocation2 + $0xc8] sm:$0xff]
          %v1155 = vld [vmem:[#allocation2 + $0xd0] sm:$0xff]
          %v1156 = vld [vmem:[#allocation2 + $0xd8] sm:$0xff]
          %v1157 = vld [vmem:[#allocation2 + $0xe0] sm:$0xff]
          %v1158 = vld [vmem:[#allocation2 + $0xe8] sm:$0xff]
          %v1159 = vld [vmem:[#allocation2 + $0xf0] sm:$0xff]
          %v1160 = vld [vmem:[#allocation2 + $0xf8] sm:$0xff]
          %v1161 = vld [vmem:[#allocation2 + $0x100] sm:$0xff]
          %v1162 = vld [vmem:[#allocation2 + $0x108] sm:$0xff]
          %v1163 = vld [vmem:[#allocation2 + $0x110] sm:$0xff]
          %v1164 = vld [vmem:[#allocation2 + $0x118] sm:$0xff]
          %v1165 = vld [vmem:[#allocation2 + $0x120] sm:$0xff]
          %v1166 = vld [vmem:[#allocation2 + $0x128] sm:$0xff]
          %v1167 = vld [vmem:[#allocation2 + $0x130] sm:$0xff]
          %v1168 = vld [vmem:[#allocation2 + $0x138] sm:$0xff]
          %v1169 = vld [vmem:[#allocation2 + $0x140] sm:$0xff]
          %v1170 = vld [vmem:[#allocation2 + $0x148] sm:$0xff]
          %v1171 = vld [vmem:[#allocation2 + $0x150] sm:$0xff]
          %v1172 = vld [vmem:[#allocation2 + $0x158] sm:$0xff]
          %v1173 = vld [vmem:[#allocation2 + $0x160] sm:$0xff]
          %v1174 = vld [vmem:[#allocation2 + $0x168] sm:$0xff]
          %v1175 = vld [vmem:[#allocation2 + $0x170] sm:$0xff]
          %v1176 = vld [vmem:[#allocation2 + $0x178] sm:$0xff]
          %v1177 = vld [vmem:[#allocation2 + $0x180] sm:$0xff]
          %v1178 = vld [vmem:[#allocation2 + $0x188] sm:$0xff]
          %v1179 = vld [vmem:[#allocation2 + $0x190] sm:$0xff]
          %v1180 = vld [vmem:[#allocation2 + $0x198] sm:$0xff]
          %v1181 = vld [vmem:[#allocation2 + $0x1a0] sm:$0xff]
          %v1182 = vld [vmem:[#allocation2 + $0x1a8] sm:$0xff]
          %v1183 = vld [vmem:[#allocation2 + $0x1b0] sm:$0xff]
          %v1184 = vld [vmem:[#allocation2 + $0x1b8] sm:$0xff]
          %v1185 = vld [vmem:[#allocation2 + $0x1c0] sm:$0xff]
          %v1186 = vld [vmem:[#allocation2 + $0x1c8] sm:$0xff]
          %v1187 = vld [vmem:[#allocation2 + $0x1d0] sm:$0xff]
          %v1188 = vld [vmem:[#allocation2 + $0x1d8] sm:$0xff]
          %v1189 = vld [vmem:[#allocation2 + $0x1e0] sm:$0xff]
          %v1190 = vld [vmem:[#allocation2 + $0x1e8] sm:$0xff]
          %v1191 = vld [vmem:[#allocation2 + $0x1f0] sm:$0xff]
          %v1192 = vld [vmem:[#allocation2 + $0x1f8] sm:$0xff]
          %v1193 = vld [vmem:[%s254] sm:$0x1]
          %v1195 = vlaneseq
          %v1196 = vshrl.u32 %v1195, 7
          %v1197 = vsub.s32 0, %v1196
          %v1198 = vrot.slane %v1193, %v1197
          %v1200 = vadd.f32 %v1129, %v1198
          %v1201 = vadd.f32 %v1130, %v1198
          %v1202 = vadd.f32 %v1131, %v1198
          %v1203 = vadd.f32 %v1132, %v1198
          %v1204 = vadd.f32 %v1133, %v1198
          %v1205 = vadd.f32 %v1134, %v1198
          %v1206 = vadd.f32 %v1135, %v1198
          %v1207 = vadd.f32 %v1136, %v1198
          %v1208 = vadd.f32 %v1137, %v1198
          %v1209 = vadd.f32 %v1138, %v1198
          %v1210 = vadd.f32 %v1139, %v1198
          %v1211 = vadd.f32 %v1140, %v1198
          %v1212 = vadd.f32 %v1141, %v1198
          %v1213 = vadd.f32 %v1142, %v1198
          %v1214 = vadd.f32 %v1143, %v1198
          %v1215 = vadd.f32 %v1144, %v1198
          %v1216 = vadd.f32 %v1145, %v1198
          %v1217 = vadd.f32 %v1146, %v1198
          %v1218 = vadd.f32 %v1147, %v1198
          %v1219 = vadd.f32 %v1148, %v1198
          %v1220 = vadd.f32 %v1149, %v1198
          %v1221 = vadd.f32 %v1150, %v1198
          %v1222 = vadd.f32 %v1151, %v1198
          %v1223 = vadd.f32 %v1152, %v1198
          %v1224 = vadd.f32 %v1153, %v1198
          %v1225 = vadd.f32 %v1154, %v1198
          %v1226 = vadd.f32 %v1155, %v1198
          %v1227 = vadd.f32 %v1156, %v1198
          %v1228 = vadd.f32 %v1157, %v1198
          %v1229 = vadd.f32 %v1158, %v1198
          %v1230 = vadd.f32 %v1159, %v1198
          %v1231 = vadd.f32 %v1160, %v1198
          %v1232 = vadd.f32 %v1161, %v1198
          %v1233 = vadd.f32 %v1162, %v1198
          %v1234 = vadd.f32 %v1163, %v1198
          %v1235 = vadd.f32 %v1164, %v1198
          %v1236 = vadd.f32 %v1165, %v1198
          %v1237 = vadd.f32 %v1166, %v1198
          %v1238 = vadd.f32 %v1167, %v1198
          %v1239 = vadd.f32 %v1168, %v1198
          %v1240 = vadd.f32 %v1169, %v1198
          %v1241 = vadd.f32 %v1170, %v1198
          %v1242 = vadd.f32 %v1171, %v1198
          %v1243 = vadd.f32 %v1172, %v1198
          %v1244 = vadd.f32 %v1173, %v1198
          %v1245 = vadd.f32 %v1174, %v1198
          %v1246 = vadd.f32 %v1175, %v1198
          %v1247 = vadd.f32 %v1176, %v1198
          %v1248 = vadd.f32 %v1177, %v1198
          %v1249 = vadd.f32 %v1178, %v1198
          %v1250 = vadd.f32 %v1179, %v1198
          %v1251 = vadd.f32 %v1180, %v1198
          %v1252 = vadd.f32 %v1181, %v1198
          %v1253 = vadd.f32 %v1182, %v1198
          %v1254 = vadd.f32 %v1183, %v1198
          %v1255 = vadd.f32 %v1184, %v1198
          %v1256 = vadd.f32 %v1185, %v1198
          %v1257 = vadd.f32 %v1186, %v1198
          %v1258 = vadd.f32 %v1187, %v1198
          %v1259 = vadd.f32 %v1188, %v1198
          %v1260 = vadd.f32 %v1189, %v1198
          %v1261 = vadd.f32 %v1190, %v1198
          %v1262 = vadd.f32 %v1191, %v1198
          %v1263 = vadd.f32 %v1192, %v1198
          %v1264 = vmax.f32 %v1200, 0.0
          %v1265 = vmax.f32 %v1201, 0.0
          %v1266 = vmax.f32 %v1202, 0.0
          %v1267 = vmax.f32 %v1203, 0.0
          %v1268 = vmax.f32 %v1204, 0.0
          %v1269 = vmax.f32 %v1205, 0.0
          %v1270 = vmax.f32 %v1206, 0.0
          %v1271 = vmax.f32 %v1207, 0.0
          %v1272 = vmax.f32 %v1208, 0.0
          %v1273 = vmax.f32 %v1209, 0.0
          %v1274 = vmax.f32 %v1210, 0.0
          %v1275 = vmax.f32 %v1211, 0.0
          %v1276 = vmax.f32 %v1212, 0.0
          %v1277 = vmax.f32 %v1213, 0.0
          %v1278 = vmax.f32 %v1214, 0.0
          %v1279 = vmax.f32 %v1215, 0.0
          %v1280 = vmax.f32 %v1216, 0.0
          %v1281 = vmax.f32 %v1217, 0.0
          %v1282 = vmax.f32 %v1218, 0.0
          %v1283 = vmax.f32 %v1219, 0.0
          %v1284 = vmax.f32 %v1220, 0.0
          %v1285 = vmax.f32 %v1221, 0.0
          %v1286 = vmax.f32 %v1222, 0.0
          %v1287 = vmax.f32 %v1223, 0.0
          %v1288 = vmax.f32 %v1224, 0.0
          %v1289 = vmax.f32 %v1225, 0.0
          %v1290 = vmax.f32 %v1226, 0.0
          %v1291 = vmax.f32 %v1227, 0.0
          %v1292 = vmax.f32 %v1228, 0.0
          %v1293 = vmax.f32 %v1229, 0.0
          %v1294 = vmax.f32 %v1230, 0.0
          %v1295 = vmax.f32 %v1231, 0.0
          %v1296 = vmax.f32 %v1232, 0.0
          %v1297 = vmax.f32 %v1233, 0.0
          %v1298 = vmax.f32 %v1234, 0.0
          %v1299 = vmax.f32 %v1235, 0.0
          %v1300 = vmax.f32 %v1236, 0.0
          %v1301 = vmax.f32 %v1237, 0.0
          %v1302 = vmax.f32 %v1238, 0.0
          %v1303 = vmax.f32 %v1239, 0.0
          %v1304 = vmax.f32 %v1240, 0.0
          %v1305 = vmax.f32 %v1241, 0.0
          %v1306 = vmax.f32 %v1242, 0.0
          %v1307 = vmax.f32 %v1243, 0.0
          %v1308 = vmax.f32 %v1244, 0.0
          %v1309 = vmax.f32 %v1245, 0.0
          %v1310 = vmax.f32 %v1246, 0.0
          %v1311 = vmax.f32 %v1247, 0.0
          %v1312 = vmax.f32 %v1248, 0.0
          %v1313 = vmax.f32 %v1249, 0.0
          %v1314 = vmax.f32 %v1250, 0.0
          %v1315 = vmax.f32 %v1251, 0.0
          %v1316 = vmax.f32 %v1252, 0.0
          %v1317 = vmax.f32 %v1253, 0.0
          %v1318 = vmax.f32 %v1254, 0.0
          %v1319 = vmax.f32 %v1255, 0.0
          %v1320 = vmax.f32 %v1256, 0.0
          %v1321 = vmax.f32 %v1257, 0.0
          %v1322 = vmax.f32 %v1258, 0.0
          %v1323 = vmax.f32 %v1259, 0.0
          %v1324 = vmax.f32 %v1260, 0.0
          %v1325 = vmax.f32 %v1261, 0.0
          %v1326 = vmax.f32 %v1262, 0.0
          %v1327 = vmax.f32 %v1263, 0.0
          %v1328 = vpack.c.bf16 %v1265, %v1264
          %v1329 = vpack.c.bf16 %v1267, %v1266
          %v1330 = vpack.c.bf16 %v1269, %v1268
          %v1331 = vpack.c.bf16 %v1271, %v1270
          %v1332 = vpack.c.bf16 %v1273, %v1272
          %v1333 = vpack.c.bf16 %v1275, %v1274
          %v1334 = vpack.c.bf16 %v1277, %v1276
          %v1335 = vpack.c.bf16 %v1279, %v1278
          %v1336 = vpack.c.bf16 %v1281, %v1280
          %v1337 = vpack.c.bf16 %v1283, %v1282
          %v1338 = vpack.c.bf16 %v1285, %v1284
          %v1339 = vpack.c.bf16 %v1287, %v1286
          %v1340 = vpack.c.bf16 %v1289, %v1288
          %v1341 = vpack.c.bf16 %v1291, %v1290
          %v1342 = vpack.c.bf16 %v1293, %v1292
          %v1343 = vpack.c.bf16 %v1295, %v1294
          %v1344 = vpack.c.bf16 %v1297, %v1296
          %v1345 = vpack.c.bf16 %v1299, %v1298
          %v1346 = vpack.c.bf16 %v1301, %v1300
          %v1347 = vpack.c.bf16 %v1303, %v1302
          %v1348 = vpack.c.bf16 %v1305, %v1304
          %v1349 = vpack.c.bf16 %v1307, %v1306
          %v1350 = vpack.c.bf16 %v1309, %v1308
          %v1351 = vpack.c.bf16 %v1311, %v1310
          %v1352 = vpack.c.bf16 %v1313, %v1312
          %v1353 = vpack.c.bf16 %v1315, %v1314
          %v1354 = vpack.c.bf16 %v1317, %v1316
          %v1355 = vpack.c.bf16 %v1319, %v1318
          %v1356 = vpack.c.bf16 %v1321, %v1320
          %v1357 = vpack.c.bf16 %v1323, %v1322
          %v1358 = vpack.c.bf16 %v1325, %v1324
          %v1359 = vpack.c.bf16 %v1327, %v1326
          %v1392 = vunpack.c.l.b16 %v1328
          %v1393 = vunpack.c.h.b16 %v1328
          %v1394 = vunpack.c.l.b16 %v1329
          %v1395 = vunpack.c.h.b16 %v1329
          %v1396 = vunpack.c.l.b16 %v1330
          %v1397 = vunpack.c.h.b16 %v1330
          %v1398 = vunpack.c.l.b16 %v1331
          %v1399 = vunpack.c.h.b16 %v1331
          %v1400 = vunpack.c.l.b16 %v1332
          %v1401 = vunpack.c.h.b16 %v1332
          %v1402 = vunpack.c.l.b16 %v1333
          %v1403 = vunpack.c.h.b16 %v1333
          %v1404 = vunpack.c.l.b16 %v1334
          %v1405 = vunpack.c.h.b16 %v1334
          %v1406 = vunpack.c.l.b16 %v1335
          %v1407 = vunpack.c.h.b16 %v1335
          %v1408 = vunpack.c.l.b16 %v1336
          %v1409 = vunpack.c.h.b16 %v1336
          %v1410 = vunpack.c.l.b16 %v1337
          %v1411 = vunpack.c.h.b16 %v1337
          %v1412 = vunpack.c.l.b16 %v1338
          %v1413 = vunpack.c.h.b16 %v1338
          %v1414 = vunpack.c.l.b16 %v1339
          %v1415 = vunpack.c.h.b16 %v1339
          %v1416 = vunpack.c.l.b16 %v1340
          %v1417 = vunpack.c.h.b16 %v1340
          %v1418 = vunpack.c.l.b16 %v1341
          %v1419 = vunpack.c.h.b16 %v1341
          %v1420 = vunpack.c.l.b16 %v1342
          %v1421 = vunpack.c.h.b16 %v1342
          %v1422 = vunpack.c.l.b16 %v1343
          %v1423 = vunpack.c.h.b16 %v1343
          %v1424 = vunpack.c.l.b16 %v1344
          %v1425 = vunpack.c.h.b16 %v1344
          %v1426 = vunpack.c.l.b16 %v1345
          %v1427 = vunpack.c.h.b16 %v1345
          %v1428 = vunpack.c.l.b16 %v1346
          %v1429 = vunpack.c.h.b16 %v1346
          %v1430 = vunpack.c.l.b16 %v1347
          %v1431 = vunpack.c.h.b16 %v1347
          %v1432 = vunpack.c.l.b16 %v1348
          %v1433 = vunpack.c.h.b16 %v1348
          %v1434 = vunpack.c.l.b16 %v1349
          %v1435 = vunpack.c.h.b16 %v1349
          %v1436 = vunpack.c.l.b16 %v1350
          %v1437 = vunpack.c.h.b16 %v1350
          %v1438 = vunpack.c.l.b16 %v1351
          %v1439 = vunpack.c.h.b16 %v1351
          %v1440 = vunpack.c.l.b16 %v1352
          %v1441 = vunpack.c.h.b16 %v1352
          %v1442 = vunpack.c.l.b16 %v1353
          %v1443 = vunpack.c.h.b16 %v1353
          %v1444 = vunpack.c.l.b16 %v1354
          %v1445 = vunpack.c.h.b16 %v1354
          %v1446 = vunpack.c.l.b16 %v1355
          %v1447 = vunpack.c.h.b16 %v1355
          %v1448 = vunpack.c.l.b16 %v1356
          %v1449 = vunpack.c.h.b16 %v1356
          %v1450 = vunpack.c.l.b16 %v1357
          %v1451 = vunpack.c.h.b16 %v1357
          %v1452 = vunpack.c.l.b16 %v1358
          %v1453 = vunpack.c.h.b16 %v1358
          %v1454 = vunpack.c.l.b16 %v1359
          %v1455 = vunpack.c.h.b16 %v1359
          %v1456 = vpack.c.b16 %v1392, %v1392
          %v1457 = vpack.c.b16 %v1393, %v1393
          %v1458 = vpack.c.b16 %v1394, %v1394
          %v1459 = vpack.c.b16 %v1395, %v1395
          %v1460 = vpack.c.b16 %v1396, %v1396
          %v1461 = vpack.c.b16 %v1397, %v1397
          %v1462 = vpack.c.b16 %v1398, %v1398
          %v1463 = vpack.c.b16 %v1399, %v1399
          %v1464 = vpack.c.b16 %v1400, %v1400
          %v1465 = vpack.c.b16 %v1401, %v1401
          %v1466 = vpack.c.b16 %v1402, %v1402
          %v1467 = vpack.c.b16 %v1403, %v1403
          %v1468 = vpack.c.b16 %v1404, %v1404
          %v1469 = vpack.c.b16 %v1405, %v1405
          %v1470 = vpack.c.b16 %v1406, %v1406
          %v1471 = vpack.c.b16 %v1407, %v1407
          %v1472 = vpack.c.b16 %v1408, %v1408
          %v1473 = vpack.c.b16 %v1409, %v1409
          %v1474 = vpack.c.b16 %v1410, %v1410
          %v1475 = vpack.c.b16 %v1411, %v1411
          %v1476 = vpack.c.b16 %v1412, %v1412
          %v1477 = vpack.c.b16 %v1413, %v1413
          %v1478 = vpack.c.b16 %v1414, %v1414
          %v1479 = vpack.c.b16 %v1415, %v1415
          %v1480 = vpack.c.b16 %v1416, %v1416
          %v1481 = vpack.c.b16 %v1417, %v1417
          %v1482 = vpack.c.b16 %v1418, %v1418
          %v1483 = vpack.c.b16 %v1419, %v1419
          %v1484 = vpack.c.b16 %v1420, %v1420
          %v1485 = vpack.c.b16 %v1421, %v1421
          %v1486 = vpack.c.b16 %v1422, %v1422
          %v1487 = vpack.c.b16 %v1423, %v1423
          %v1488 = vpack.c.b16 %v1424, %v1424
          %v1489 = vpack.c.b16 %v1425, %v1425
          %v1490 = vpack.c.b16 %v1426, %v1426
          %v1491 = vpack.c.b16 %v1427, %v1427
          %v1492 = vpack.c.b16 %v1428, %v1428
          %v1493 = vpack.c.b16 %v1429, %v1429
          %v1494 = vpack.c.b16 %v1430, %v1430
          %v1495 = vpack.c.b16 %v1431, %v1431
          %v1496 = vpack.c.b16 %v1432, %v1432
          %v1497 = vpack.c.b16 %v1433, %v1433
          %v1498 = vpack.c.b16 %v1434, %v1434
          %v1499 = vpack.c.b16 %v1435, %v1435
          %v1500 = vpack.c.b16 %v1436, %v1436
          %v1501 = vpack.c.b16 %v1437, %v1437
          %v1502 = vpack.c.b16 %v1438, %v1438
          %v1503 = vpack.c.b16 %v1439, %v1439
          %v1504 = vpack.c.b16 %v1440, %v1440
          %v1505 = vpack.c.b16 %v1441, %v1441
          %v1506 = vpack.c.b16 %v1442, %v1442
          %v1507 = vpack.c.b16 %v1443, %v1443
          %v1508 = vpack.c.b16 %v1444, %v1444
          %v1509 = vpack.c.b16 %v1445, %v1445
          %v1510 = vpack.c.b16 %v1446, %v1446
          %v1511 = vpack.c.b16 %v1447, %v1447
          %v1512 = vpack.c.b16 %v1448, %v1448
          %v1513 = vpack.c.b16 %v1449, %v1449
          %v1514 = vpack.c.b16 %v1450, %v1450
          %v1515 = vpack.c.b16 %v1451, %v1451
          %v1516 = vpack.c.b16 %v1452, %v1452
          %v1517 = vpack.c.b16 %v1453, %v1453
          %v1518 = vpack.c.b16 %v1454, %v1454
          %v1519 = vpack.c.b16 %v1455, %v1455
          %1584 = vst [vmem:[%s249] sm:$0xf] %v1456
          %1585 = vst [vmem:[%s249 + $0x4] sm:$0xf] %v1457
          %1586 = vst [vmem:[%s249 + $0x8] sm:$0xf] %v1458
          %1587 = vst [vmem:[%s249 + $0xc] sm:$0xf] %v1459
          %1588 = vst [vmem:[%s249 + $0x10] sm:$0xf] %v1460
          %1589 = vst [vmem:[%s249 + $0x14] sm:$0xf] %v1461
          %1590 = vst [vmem:[%s249 + $0x18] sm:$0xf] %v1462
          %1591 = vst [vmem:[%s249 + $0x1c] sm:$0xf] %v1463
          %1592 = vst [vmem:[%s249 + $0x20] sm:$0xf] %v1464
          %1593 = vst [vmem:[%s249 + $0x24] sm:$0xf] %v1465
          %1594 = vst [vmem:[%s249 + $0x28] sm:$0xf] %v1466
          %1595 = vst [vmem:[%s249 + $0x2c] sm:$0xf] %v1467
          %1596 = vst [vmem:[%s249 + $0x30] sm:$0xf] %v1468
          %1597 = vst [vmem:[%s249 + $0x34] sm:$0xf] %v1469
          %1598 = vst [vmem:[%s249 + $0x38] sm:$0xf] %v1470
          %1599 = vst [vmem:[%s249 + $0x3c] sm:$0xf] %v1471
          %1600 = vst [vmem:[%s249 + $0x40] sm:$0xf] %v1472
          %1601 = vst [vmem:[%s249 + $0x44] sm:$0xf] %v1473
          %1602 = vst [vmem:[%s249 + $0x48] sm:$0xf] %v1474
          %1603 = vst [vmem:[%s249 + $0x4c] sm:$0xf] %v1475
          %1604 = vst [vmem:[%s249 + $0x50] sm:$0xf] %v1476
          %1605 = vst [vmem:[%s249 + $0x54] sm:$0xf] %v1477
          %1606 = vst [vmem:[%s249 + $0x58] sm:$0xf] %v1478
          %1607 = vst [vmem:[%s249 + $0x5c] sm:$0xf] %v1479
          %1608 = vst [vmem:[%s249 + $0x60] sm:$0xf] %v1480
          %1609 = vst [vmem:[%s249 + $0x64] sm:$0xf] %v1481
          %1610 = vst [vmem:[%s249 + $0x68] sm:$0xf] %v1482
          %1611 = vst [vmem:[%s249 + $0x6c] sm:$0xf] %v1483
          %1612 = vst [vmem:[%s249 + $0x70] sm:$0xf] %v1484
          %1613 = vst [vmem:[%s249 + $0x74] sm:$0xf] %v1485
          %1614 = vst [vmem:[%s249 + $0x78] sm:$0xf] %v1486
          %1615 = vst [vmem:[%s249 + $0x7c] sm:$0xf] %v1487
          %1616 = vst [vmem:[%s249 + $0x80] sm:$0xf] %v1488
          %1617 = vst [vmem:[%s249 + $0x84] sm:$0xf] %v1489
          %1618 = vst [vmem:[%s249 + $0x88] sm:$0xf] %v1490
          %1619 = vst [vmem:[%s249 + $0x8c] sm:$0xf] %v1491
          %1620 = vst [vmem:[%s249 + $0x90] sm:$0xf] %v1492
          %1621 = vst [vmem:[%s249 + $0x94] sm:$0xf] %v1493
          %1622 = vst [vmem:[%s249 + $0x98] sm:$0xf] %v1494
          %1623 = vst [vmem:[%s249 + $0x9c] sm:$0xf] %v1495
          %1624 = vst [vmem:[%s249 + $0xa0] sm:$0xf] %v1496
          %1625 = vst [vmem:[%s249 + $0xa4] sm:$0xf] %v1497
          %1626 = vst [vmem:[%s249 + $0xa8] sm:$0xf] %v1498
          %1627 = vst [vmem:[%s249 + $0xac] sm:$0xf] %v1499
          %1628 = vst [vmem:[%s249 + $0xb0] sm:$0xf] %v1500
          %1629 = vst [vmem:[%s249 + $0xb4] sm:$0xf] %v1501
          %1630 = vst [vmem:[%s249 + $0xb8] sm:$0xf] %v1502
          %1631 = vst [vmem:[%s249 + $0xbc] sm:$0xf] %v1503
          %1632 = vst [vmem:[%s249 + $0xc0] sm:$0xf] %v1504
          %1633 = vst [vmem:[%s249 + $0xc4] sm:$0xf] %v1505
          %1634 = vst [vmem:[%s249 + $0xc8] sm:$0xf] %v1506
          %1635 = vst [vmem:[%s249 + $0xcc] sm:$0xf] %v1507
          %1636 = vst [vmem:[%s249 + $0xd0] sm:$0xf] %v1508
          %1637 = vst [vmem:[%s249 + $0xd4] sm:$0xf] %v1509
          %1638 = vst [vmem:[%s249 + $0xd8] sm:$0xf] %v1510
          %1639 = vst [vmem:[%s249 + $0xdc] sm:$0xf] %v1511
          %1640 = vst [vmem:[%s249 + $0xe0] sm:$0xf] %v1512
          %1641 = vst [vmem:[%s249 + $0xe4] sm:$0xf] %v1513
          %1642 = vst [vmem:[%s249 + $0xe8] sm:$0xf] %v1514
          %1643 = vst [vmem:[%s249 + $0xec] sm:$0xf] %v1515
          %1644 = vst [vmem:[%s249 + $0xf0] sm:$0xf] %v1516
          %1645 = vst [vmem:[%s249 + $0xf4] sm:$0xf] %v1517
          %1646 = vst [vmem:[%s249 + $0xf8] sm:$0xf] %v1518
          %1647 = vst [vmem:[%s249 + $0xfc] sm:$0xf] %v1519
        $region48: #{tpu_custom_call.1} parent=31 // pred_fallthru
          _
        %s1648 = sand.u32 %s132, 1
        %s1649 = scalar_lea.sflag [#allocation5], %s1648
        %s1650 = sand.u32 %s132, 1
        %s1651 = smul.addr %s1650, 256
        %s1652 = scalar_lea.vmem [#allocation8], %s1651
        // Predicated region
        $region49: #{tpu_custom_call.1} parent=31 // pred_check
          %p1653 = pneg %p142
        $region50: #{tpu_custom_call.1} parent=31 // pred_check_branch
          %1655 = sbr.rel (%p1653) target = $region52
        $region51: #{tpu_custom_call.1} parent=31 // pred_region
          %s1656 = smul.u32 64, %s26
          %s1658 = ssub.s32 4096, 4096
          %1659 = vsyncadd %s1649, %s1658
          %s1660 = sadd.s32 %s27, %s1656
          %s1661 = smul.addr %s1660, 64
          %s1662 = scalar_lea.hbm %s3, %s1661
          %s1663 = sshll.u32 %s1652, 4
          %s1664 = int_to_ptr.vmem [resolvable:$true] %s1663
          %1669 = dma.vmem_to_hbm [thread:$0]  %s1664, 4096, %s1662, %s1649, 64, 64, 4
        $region52: #{tpu_custom_call.1} parent=31 // pred_fallthru
          _
      $region32: #{tpu_custom_call.1} parent=5 // pred_fallthru
        _
      %p1670 = scmp.le.s32.totalorder 2, %s16
      // Predicated region
      $region53: #{tpu_custom_call.1} parent=5 // pred_check
        %p1671 = pneg %p1670
      $region54: #{tpu_custom_call.1} parent=5 // pred_check_branch
        %1673 = sbr.rel (%p1671) target = $region56
      $region55: #{tpu_custom_call.1} parent=5 // pred_region
        %s1674 = ssub.s32 %s16, 2
        // Predicated region
        $region57: #{tpu_custom_call.1} parent=55 // pred_check
          %p1675 = pneg %p148
        $region58: #{tpu_custom_call.1} parent=55 // pred_check_branch
          %1677 = sbr.rel (%p1675) target = $region60
        $region59: #{tpu_custom_call.1} parent=55 // pred_region
          %s1678 = sand.u32 %s133, 1
          %s1679 = scalar_lea.sflag [#allocation5], %s1678
          %s1680 = sand.u32 %s133, 1
          %s1681 = smul.addr %s1680, 256
          %s1682 = scalar_lea.vmem [#allocation8], %s1681
          %1683 = dma.done %s1679, 4096
        $region60: #{tpu_custom_call.1} parent=55 // pred_fallthru
          _
      $region56: #{tpu_custom_call.1} parent=5 // pred_fallthru
        _
    $region6: #{tpu_custom_call.1} parent=1 // loop_footer
      %s20 = sadd.s32 1, %s16
    $region7: #{tpu_custom_call.1} parent=1 // loop_footer_branch
      %15 = sbr.rel target = $region3
    $region8: #{tpu_custom_call.1} parent=1 // loop_exit
      _
    %1684 = vsyncpa [#allocation4], 1
    %s1685 = scalar_lea.sflag [#allocation4], 1
    %1686 = vsyncpa %s1685, 1
    %1687 = vsyncpa [#allocation7], 1
    %1688 = vsyncpa [#allocation5], 1
    %s1689 = scalar_lea.sflag [#allocation5], 1
    %1690 = vsyncpa %s1689, 1

</llo_original>
